<compile_context>
chip_gen: v7x
topology: tpu7x:2x2x1
jax: 0.10.0
libtpu: 0.0.40
codegen_flags: <defaults>
</compile_context>

<pallas_src>
from functools import partial

import jax
import jax.numpy as jnp
from jax import lax
from jax.experimental import pallas as pl
from jax.experimental.pallas import tpu as pltpu


_LANE = 128
_SUBLANE = 8
_NEG_INF = -1e30

_VMEM_SPEC = pl.BlockSpec(memory_space=pltpu.MemorySpace.VMEM)


def _round_up(x, m):
    return (x + m - 1) // m * m


def _pad2(a, rows, cols):
    return jnp.pad(a, ((0, rows - a.shape[0]), (0, cols - a.shape[1])))


# ----------------------------------------------------------------------------
# Shared math: used by the Pallas kernel (on loaded refs) AND by the
# same-numerics JAX reference, so the correctness check is tight.
# ----------------------------------------------------------------------------
def _fused_math(x, adjb, w1, w2, wf1, wf2, wf3, vec, *, f1p, f2p, cp):
    adj_bias = adjb.astype(jnp.float32)          # [Np, Np], 0 / -1e30 (from bf16)

    # packed small vectors: [8, Hp]
    b1, b2 = vec[0:1, :], vec[1:2, :]            # GAT biases
    bf1, bf2, bf3 = vec[2:3, :f1p], vec[3:4, :f2p], vec[4:5, :cp]   # FC biases
    as1, as2 = vec[5:6, :], vec[6:7, :]          # att_src rows (zero-padded)
    sel = vec[7:8, :]                            # one-hot at the folded att_dst col

    def gat(xin, w, a_src_row, bias_row):
        # Augmented transform: columns [0:H) = x@W, column H = (x@W)·att_dst
        h = jnp.dot(xin.astype(jnp.bfloat16), w,
                    preferred_element_type=jnp.float32)             # [Np, Hp]
        # a_dst[i] = h[i]·att_dst  -> pulled from the folded column (VPU+XLU,
        # no extra MXU pass).
        a_dst = jnp.sum(h * sel, axis=-1, keepdims=True)            # [Np, 1]
        # a_src[j] = h[j]·att_src  -> transpose-free row via dot_general.
        a_src = lax.dot_general(a_src_row, h, (((1,), (1,)), ((), ())),
                                preferred_element_type=jnp.float32)  # [1, Np]
        e = a_dst + a_src                              # e[i, j] = dst_i + src_j
        e = jnp.where(e > 0, e, 0.2 * e)               # GATConv leaky_relu(0.2)
        e = e + adj_bias                               # -1e30 on non-edges
        e = e - jnp.max(e, axis=-1, keepdims=True)
        p = jnp.exp(e)
        attn = p / jnp.sum(p, axis=-1, keepdims=True)  # exact f32 softmax
        out = jnp.dot(attn, h, preferred_element_type=jnp.float32) + bias_row
        return jnp.where(out > 0, out, 0.01 * out)     # module's F.leaky_relu

    xh = gat(x, w1, as1, b1)
    xh = gat(xh, w2, as2, b2)

    # MLP head: Linear -> ReLU -> Linear -> ReLU -> Linear (dropouts: no-op)
    h = jnp.maximum(jnp.dot(xh.astype(jnp.bfloat16), wf1,
                            preferred_element_type=jnp.float32) + bf1, 0.0)
    h = jnp.maximum(jnp.dot(h.astype(jnp.bfloat16), wf2,
                            preferred_element_type=jnp.float32) + bf2, 0.0)
    return jnp.dot(h.astype(jnp.bfloat16), wf3,
                   preferred_element_type=jnp.float32) + bf3


def _gat_localization_kernel(x_ref, adjb_ref, w1_ref, w2_ref,
                             wf1_ref, wf2_ref, wf3_ref, vec_ref, out_ref,
                             *, f1p, f2p, cp):
    out_ref[...] = _fused_math(
        x_ref[...], adjb_ref[...], w1_ref[...], w2_ref[...],
        wf1_ref[...], wf2_ref[...], wf3_ref[...], vec_ref[...],
        f1p=f1p, f2p=f2p, cp=cp)


# ----------------------------------------------------------------------------
# One-time host-side preparation (cached across calls for a static graph).
# ----------------------------------------------------------------------------
def prepare_gat_localization(params, edge_index, num_nodes):
    g1, g2, fc = params["gat1"], params["gat2"], params["fc"]
    d_in, h_dim = g1["w"].shape
    f1, f2, c = fc["w1"].shape[1], fc["w2"].shape[1], fc["w3"].shape[1]

    n_p = _round_up(max(num_nodes, _SUBLANE), _SUBLANE)
    d_p = _round_up(d_in, _LANE)
    h_p = _round_up(h_dim + 1, _LANE)      # +1 lane: the folded att_dst column
    f1_p = _round_up(f1, _LANE)
    f2_p = _round_up(f2, _LANE)
    c_p = _round_up(c, _LANE)

    # Additive attention bias (0 on edges/self-loops, -1e30 elsewhere), stored
    # in bf16 to halve the only O(N^2) operand.  -1e30 is representable in bf16.
    src, dst = edge_index[0], edge_index[1]
    adj = jnp.zeros((n_p, n_p), jnp.float32).at[dst, src].set(1.0)
    adj = adj.at[jnp.arange(num_nodes), jnp.arange(num_nodes)].set(1.0)
    adj_bias = jnp.where(adj > 0, 0.0, _NEG_INF).astype(jnp.bfloat16)

    def aug_w(w, att_dst, rows_p, cols_p):
        r, co = w.shape
        wp = jnp.zeros((rows_p, cols_p), jnp.float32)
        wp = wp.at[:r, :co].set(w)
        wp = wp.at[:r, co:co + 1].set(w @ att_dst.T)   # folded att_dst column
        return wp.astype(jnp.bfloat16)

    # Pack all tiny vector operands into one [8, Hp] array (one DMA).
    vec = jnp.zeros((_SUBLANE, h_p), jnp.float32)
    vec = vec.at[0:1, :h_dim].set(g1["bias"])
    vec = vec.at[1:2, :h_dim].set(g2["bias"])
    vec = vec.at[2:3, :f1].set(fc["b1"])
    vec = vec.at[3:4, :f2].set(fc["b2"])
    vec = vec.at[4:5, :c].set(fc["b3"])
    vec = vec.at[5:6, :h_dim].set(g1["att_src"])
    vec = vec.at[6:7, :h_dim].set(g2["att_src"])
    vec = vec.at[7, h_dim].set(1.0)   # one-hot selecting the folded column
                                      # (both GAT layers share out-width h_dim)

    prepped = dict(
        adj_bias=adj_bias,
        w1=aug_w(g1["w"], g1["att_dst"], d_p, h_p),
        w2=aug_w(g2["w"], g2["att_dst"], h_p, h_p),
        wf1=_pad2(fc["w1"], h_p, f1_p).astype(jnp.bfloat16),
        wf2=_pad2(fc["w2"], f1_p, f2_p).astype(jnp.bfloat16),
        wf3=_pad2(fc["w3"], f2_p, c_p).astype(jnp.bfloat16),
        vec=vec,
    )
    return prepped


# ----------------------------------------------------------------------------
# Per-call forward: pad x, one fused pallas_call, slice the real logits out.
# ----------------------------------------------------------------------------
@partial(jax.jit, static_argnames=("out_dim",))
def gat_localization_forward(x, prepped, *, out_dim):
    n_p, d_p = prepped["adj_bias"].shape[0], prepped["w1"].shape[0]
    c_p = prepped["wf3"].shape[1]
    f1_p, f2_p = prepped["wf1"].shape[1], prepped["wf2"].shape[1]
    n = x.shape[0]

    xp = _pad2(x.astype(jnp.float32), n_p, d_p)
    kernel = partial(_gat_localization_kernel, f1p=f1_p, f2p=f2_p, cp=c_p)

    out_p = pl.pallas_call(
        kernel,
        out_shape=jax.ShapeDtypeStruct((n_p, c_p), jnp.float32),
        in_specs=[_VMEM_SPEC] * 8,
        out_specs=_VMEM_SPEC,
    )(xp, prepped["adj_bias"], prepped["w1"], prepped["w2"],
      prepped["wf1"], prepped["wf2"], prepped["wf3"], prepped["vec"])
    return out_p[:n, :out_dim]


# ----------------------------------------------------------------------------
# References.
#   * same-numerics JAX (identical bf16 casts / folded column) -> tight check
#   * exact f32 PyG-style math                                   -> loose sanity
# ----------------------------------------------------------------------------
def _ref_same_numerics(x, prepped, out_dim):
    n_p, d_p = prepped["adj_bias"].shape[0], prepped["w1"].shape[0]
    f1_p, f2_p = prepped["wf1"].shape[1], prepped["wf2"].shape[1]
    c_p = prepped["wf3"].shape[1]
    xp = _pad2(x.astype(jnp.float32), n_p, d_p)
    out_p = _fused_math(xp, prepped["adj_bias"], prepped["w1"], prepped["w2"],
                        prepped["wf1"], prepped["wf2"], prepped["wf3"],
                        prepped["vec"], f1p=f1_p, f2p=f2_p, cp=c_p)
    return out_p[:x.shape[0], :out_dim]


def _ref_forward_f32(x, edge_index, params):
    n = x.shape[0]
    src, dst = edge_index[0], edge_index[1]
    adj = jnp.zeros((n, n), jnp.float32).at[dst, src].set(1.0)
    adj = jnp.maximum(adj, jnp.eye(n, dtype=jnp.float32))

    def gat(xin, layer):
        h = xin @ layer["w"]
        a_s = jnp.sum(h * layer["att_src"], axis=-1, keepdims=True)
        a_d = jnp.sum(h * layer["att_dst"], axis=-1, keepdims=True)
        e = jax.nn.leaky_relu(a_d + a_s.T, 0.2)
        e = jnp.where(adj > 0, e, _NEG_INF)
        w = jax.nn.softmax(e, axis=-1)
        return jax.nn.leaky_relu(w @ h + layer["bias"], 0.01)

    xh = gat(x, params["gat1"])
    xh = gat(xh, params["gat2"])
    fc = params["fc"]
    h = jax.nn.relu(xh @ fc["w1"] + fc["b1"])
    h = jax.nn.relu(h @ fc["w2"] + fc["b2"])
    return h @ fc["w3"] + fc["b3"]


# ----------------------------------------------------------------------------
# Deterministic parameter init (PyTorch-Linear-style uniform bounds)
# ----------------------------------------------------------------------------
def _linear(key, fan_in, fan_out):
    kw, kb = jax.random.split(key)
    bound = 1.0 / jnp.sqrt(jnp.float32(fan_in))
    w = jax.random.uniform(kw, (fan_in, fan_out), jnp.float32, -bound, bound)
    b = jax.random.uniform(kb, (1, fan_out), jnp.float32, -bound, bound)
    return w, b


def init_params(key, input_dim, hidden_dim=200):
    keys = jax.random.split(key, 6)

    def gat_init(k, d_in, d_out):
        k1, k2, k3 = jax.random.split(k, 3)
        w, _ = _linear(k1, d_in, d_out)
        scale = 1.0 / jnp.sqrt(jnp.float32(d_out))
        att_src = jax.random.uniform(k2, (1, d_out), jnp.float32, -scale, scale)
        att_dst = jax.random.uniform(k3, (1, d_out), jnp.float32, -scale, scale)
        bias = jnp.zeros((1, d_out), jnp.float32)
        return dict(w=w, att_src=att_src, att_dst=att_dst, bias=bias)

    gat1 = gat_init(keys[0], input_dim, hidden_dim)
    gat2 = gat_init(keys[1], hidden_dim, hidden_dim)
    w1, b1 = _linear(keys[2], hidden_dim, 100)
    w2, b2 = _linear(keys[3], 100, 50)
    w3, b3 = _linear(keys[4], 50, 2)
    fc = dict(w1=w1, b1=b1, w2=w2, b2=b2, w3=w3, b3=b3)
    return dict(gat1=gat1, gat2=gat2, fc=fc)


if __name__ == "__main__":
    N = 16              # graph nodes
    input_dim = 200     # node feature width (module default context)
    hidden_dim = 200

    key = jax.random.PRNGKey(0)
    k_x, k_p = jax.random.split(key)
    x = jax.random.normal(k_x, (N, input_dim), jnp.float32)

    # deterministic ring graph (both directions), edge_index = [src; dst]
    src = jnp.concatenate([jnp.arange(N), (jnp.arange(N) + 1) % N])
    dst = jnp.concatenate([(jnp.arange(N) + 1) % N, jnp.arange(N)])
    edge_index = jnp.stack([src, dst]).astype(jnp.int32)

    params = init_params(k_p, input_dim, hidden_dim)

    # One-time host-side prep (cached for the static graph); per-call work is
    # just the fused pallas_call.
    prepped = prepare_gat_localization(params, edge_index, N)

    out = gat_localization_forward(x, prepped, out_dim=2)
    out = jax.block_until_ready(out)

    assert out.shape == (N, 2), out.shape
    assert bool(jnp.all(jnp.isfinite(out)))

    # Tight check: plain-JAX with identical numerics (bf16 casts, folded att_dst,
    # exact-divide softmax) -> isolates Pallas/Mosaic lowering fidelity.
    ref_tight = _ref_same_numerics(x, prepped, out_dim=2)
    assert bool(jnp.allclose(out, ref_tight, rtol=5e-3, atol=5e-3)), (out, ref_tight)

    # Loose sanity check vs full-precision f32 PyG-style GATConv math
    # (difference is just the bf16 weight quantization).
    ref_f32 = _ref_forward_f32(x, edge_index, params)
    assert bool(jnp.allclose(out, ref_f32, rtol=5e-2, atol=5e-2)), (out, ref_f32)

    print("KERNEL_OK")
</pallas_src>

<mosaic_0001>
module attributes {stable_mosaic.version = 11 : i64} {
  func.func @_gat_localization_kernel(%arg0: memref<16x256xf32, #tpu.memory_space<vmem>>, %arg1: memref<16x16xbf16, #tpu.memory_space<vmem>>, %arg2: memref<256x256xbf16, #tpu.memory_space<vmem>>, %arg3: memref<256x256xbf16, #tpu.memory_space<vmem>>, %arg4: memref<256x128xbf16, #tpu.memory_space<vmem>>, %arg5: memref<128x128xbf16, #tpu.memory_space<vmem>>, %arg6: memref<128x128xbf16, #tpu.memory_space<vmem>>, %arg7: memref<8x256xf32, #tpu.memory_space<vmem>>, %arg8: memref<16x128xf32, #tpu.memory_space<vmem>>) attributes {dimension_semantics = [], scalar_prefetch = 0 : i64, scratch_operands = 0 : i64, tpu.core_type = #tpu.core_type<tc>} {
    %c0 = arith.constant 0 : index
    %c0_0 = arith.constant 0 : index
    %0 = vector.load %arg0[%c0, %c0_0] : memref<16x256xf32, #tpu.memory_space<vmem>>, vector<16x256xf32>
    %c0_1 = arith.constant 0 : index
    %c0_2 = arith.constant 0 : index
    %1 = vector.load %arg1[%c0_1, %c0_2] : memref<16x16xbf16, #tpu.memory_space<vmem>>, vector<16x16xbf16>
    %c0_3 = arith.constant 0 : index
    %c0_4 = arith.constant 0 : index
    %2 = vector.load %arg2[%c0_3, %c0_4] : memref<256x256xbf16, #tpu.memory_space<vmem>>, vector<256x256xbf16>
    %c0_5 = arith.constant 0 : index
    %c0_6 = arith.constant 0 : index
    %3 = vector.load %arg3[%c0_5, %c0_6] : memref<256x256xbf16, #tpu.memory_space<vmem>>, vector<256x256xbf16>
    %c0_7 = arith.constant 0 : index
    %c0_8 = arith.constant 0 : index
    %4 = vector.load %arg4[%c0_7, %c0_8] : memref<256x128xbf16, #tpu.memory_space<vmem>>, vector<256x128xbf16>
    %c0_9 = arith.constant 0 : index
    %c0_10 = arith.constant 0 : index
    %5 = vector.load %arg5[%c0_9, %c0_10] : memref<128x128xbf16, #tpu.memory_space<vmem>>, vector<128x128xbf16>
    %c0_11 = arith.constant 0 : index
    %c0_12 = arith.constant 0 : index
    %6 = vector.load %arg6[%c0_11, %c0_12] : memref<128x128xbf16, #tpu.memory_space<vmem>>, vector<128x128xbf16>
    %c0_13 = arith.constant 0 : index
    %c0_14 = arith.constant 0 : index
    %7 = vector.load %arg7[%c0_13, %c0_14] : memref<8x256xf32, #tpu.memory_space<vmem>>, vector<8x256xf32>
    %8 = arith.extf %1 : vector<16x16xbf16> to vector<16x16xf32>
    %9 = vector.extract_strided_slice %7 {offsets = [0, 0], sizes = [1, 256], strides = [1, 1]} : vector<8x256xf32> to vector<1x256xf32>
    %10 = vector.extract_strided_slice %7 {offsets = [1, 0], sizes = [1, 256], strides = [1, 1]} : vector<8x256xf32> to vector<1x256xf32>
    %11 = vector.extract_strided_slice %7 {offsets = [2, 0], sizes = [1, 128], strides = [1, 1]} : vector<8x256xf32> to vector<1x128xf32>
    %12 = vector.extract_strided_slice %7 {offsets = [3, 0], sizes = [1, 128], strides = [1, 1]} : vector<8x256xf32> to vector<1x128xf32>
    %13 = vector.extract_strided_slice %7 {offsets = [4, 0], sizes = [1, 128], strides = [1, 1]} : vector<8x256xf32> to vector<1x128xf32>
    %14 = vector.extract_strided_slice %7 {offsets = [5, 0], sizes = [1, 256], strides = [1, 1]} : vector<8x256xf32> to vector<1x256xf32>
    %15 = vector.extract_strided_slice %7 {offsets = [6, 0], sizes = [1, 256], strides = [1, 1]} : vector<8x256xf32> to vector<1x256xf32>
    %16 = vector.extract_strided_slice %7 {offsets = [7, 0], sizes = [1, 256], strides = [1, 1]} : vector<8x256xf32> to vector<1x256xf32>
    %17 = arith.truncf %0 : vector<16x256xf32> to vector<16x256xbf16>
    %cst = arith.constant dense<0.000000e+00> : vector<16x256xf32>
    %18 = tpu.matmul %17, %2, %cst {dimension_numbers = #tpu.dot_dimension_numbers<[1], [0], [0], [1], [0, 0, 1, 1], [], []>} : vector<16x256xbf16>, vector<256x256xbf16>, vector<16x256xf32> -> vector<16x256xf32>
    %19 = vector.broadcast %16 : vector<1x256xf32> to vector<16x256xf32>
    %20 = arith.mulf %18, %19 : vector<16x256xf32>
    %cst_15 = arith.constant dense<0.000000e+00> : vector<16xf32>
    %21 = vector.multi_reduction <add>, %20, %cst_15 [1] : vector<16x256xf32> to vector<16xf32>
    %22 = vector.shape_cast %21 : vector<16xf32> to vector<16x1xf32>
    %cst_16 = arith.constant dense<0.000000e+00> : vector<1x16xf32>
    %23 = tpu.matmul %14, %18, %cst_16 {dimension_numbers = #tpu.dot_dimension_numbers<[1], [1], [0], [0], [0, 0, 1, 0], [], []>} : vector<1x256xf32>, vector<16x256xf32>, vector<1x16xf32> -> vector<1x16xf32>
    %24 = vector.broadcast %22 : vector<16x1xf32> to vector<16x16xf32>
    %25 = vector.broadcast %23 : vector<1x16xf32> to vector<16x16xf32>
    %26 = arith.addf %24, %25 : vector<16x16xf32>
    %cst_17 = arith.constant 0.000000e+00 : f32
    %27 = vector.broadcast %cst_17 : f32 to vector<16x16xf32>
    %28 = arith.cmpf ogt, %26, %27 : vector<16x16xf32>
    %cst_18 = arith.constant 2.000000e-01 : f32
    %29 = vector.broadcast %cst_18 : f32 to vector<16x16xf32>
    %30 = arith.mulf %29, %26 : vector<16x16xf32>
    %31 = arith.select %28, %26, %30 : vector<16x16xi1>, vector<16x16xf32>
    %32 = arith.addf %31, %8 : vector<16x16xf32>
    %cst_19 = arith.constant dense<0xFF800000> : vector<16xf32>
    %33 = vector.multi_reduction <maximumf>, %32, %cst_19 [1] : vector<16x16xf32> to vector<16xf32>
    %34 = vector.shape_cast %33 : vector<16xf32> to vector<16x1xf32>
    %35 = vector.broadcast %34 : vector<16x1xf32> to vector<16x16xf32>
    %36 = arith.subf %32, %35 : vector<16x16xf32>
    %37 = math.exp %36 : vector<16x16xf32>
    %cst_20 = arith.constant dense<0.000000e+00> : vector<16xf32>
    %38 = vector.multi_reduction <add>, %37, %cst_20 [1] : vector<16x16xf32> to vector<16xf32>
    %39 = vector.shape_cast %38 : vector<16xf32> to vector<16x1xf32>
    %40 = vector.broadcast %39 : vector<16x1xf32> to vector<16x16xf32>
    %41 = arith.divf %37, %40 : vector<16x16xf32>
    %cst_21 = arith.constant dense<0.000000e+00> : vector<16x256xf32>
    %42 = tpu.matmul %41, %18, %cst_21 {dimension_numbers = #tpu.dot_dimension_numbers<[1], [0], [0], [1], [0, 0, 1, 1], [], []>} : vector<16x16xf32>, vector<16x256xf32>, vector<16x256xf32> -> vector<16x256xf32>
    %43 = vector.broadcast %9 : vector<1x256xf32> to vector<16x256xf32>
    %44 = arith.addf %42, %43 : vector<16x256xf32>
    %cst_22 = arith.constant 0.000000e+00 : f32
    %45 = vector.broadcast %cst_22 : f32 to vector<16x256xf32>
    %46 = arith.cmpf ogt, %44, %45 : vector<16x256xf32>
    %cst_23 = arith.constant 0.00999999977 : f32
    %47 = vector.broadcast %cst_23 : f32 to vector<16x256xf32>
    %48 = arith.mulf %47, %44 : vector<16x256xf32>
    %49 = arith.select %46, %44, %48 : vector<16x256xi1>, vector<16x256xf32>
    %50 = arith.truncf %49 : vector<16x256xf32> to vector<16x256xbf16>
    %cst_24 = arith.constant dense<0.000000e+00> : vector<16x256xf32>
    %51 = tpu.matmul %50, %3, %cst_24 {dimension_numbers = #tpu.dot_dimension_numbers<[1], [0], [0], [1], [0, 0, 1, 1], [], []>} : vector<16x256xbf16>, vector<256x256xbf16>, vector<16x256xf32> -> vector<16x256xf32>
    %52 = vector.broadcast %16 : vector<1x256xf32> to vector<16x256xf32>
    %53 = arith.mulf %51, %52 : vector<16x256xf32>
    %cst_25 = arith.constant dense<0.000000e+00> : vector<16xf32>
    %54 = vector.multi_reduction <add>, %53, %cst_25 [1] : vector<16x256xf32> to vector<16xf32>
    %55 = vector.shape_cast %54 : vector<16xf32> to vector<16x1xf32>
    %cst_26 = arith.constant dense<0.000000e+00> : vector<1x16xf32>
    %56 = tpu.matmul %15, %51, %cst_26 {dimension_numbers = #tpu.dot_dimension_numbers<[1], [1], [0], [0], [0, 0, 1, 0], [], []>} : vector<1x256xf32>, vector<16x256xf32>, vector<1x16xf32> -> vector<1x16xf32>
    %57 = vector.broadcast %55 : vector<16x1xf32> to vector<16x16xf32>
    %58 = vector.broadcast %56 : vector<1x16xf32> to vector<16x16xf32>
    %59 = arith.addf %57, %58 : vector<16x16xf32>
    %cst_27 = arith.constant 0.000000e+00 : f32
    %60 = vector.broadcast %cst_27 : f32 to vector<16x16xf32>
    %61 = arith.cmpf ogt, %59, %60 : vector<16x16xf32>
    %cst_28 = arith.constant 2.000000e-01 : f32
    %62 = vector.broadcast %cst_28 : f32 to vector<16x16xf32>
    %63 = arith.mulf %62, %59 : vector<16x16xf32>
    %64 = arith.select %61, %59, %63 : vector<16x16xi1>, vector<16x16xf32>
    %65 = arith.addf %64, %8 : vector<16x16xf32>
    %cst_29 = arith.constant dense<0xFF800000> : vector<16xf32>
    %66 = vector.multi_reduction <maximumf>, %65, %cst_29 [1] : vector<16x16xf32> to vector<16xf32>
    %67 = vector.shape_cast %66 : vector<16xf32> to vector<16x1xf32>
    %68 = vector.broadcast %67 : vector<16x1xf32> to vector<16x16xf32>
    %69 = arith.subf %65, %68 : vector<16x16xf32>
    %70 = math.exp %69 : vector<16x16xf32>
    %cst_30 = arith.constant dense<0.000000e+00> : vector<16xf32>
    %71 = vector.multi_reduction <add>, %70, %cst_30 [1] : vector<16x16xf32> to vector<16xf32>
    %72 = vector.shape_cast %71 : vector<16xf32> to vector<16x1xf32>
    %73 = vector.broadcast %72 : vector<16x1xf32> to vector<16x16xf32>
    %74 = arith.divf %70, %73 : vector<16x16xf32>
    %cst_31 = arith.constant dense<0.000000e+00> : vector<16x256xf32>
    %75 = tpu.matmul %74, %51, %cst_31 {dimension_numbers = #tpu.dot_dimension_numbers<[1], [0], [0], [1], [0, 0, 1, 1], [], []>} : vector<16x16xf32>, vector<16x256xf32>, vector<16x256xf32> -> vector<16x256xf32>
    %76 = vector.broadcast %10 : vector<1x256xf32> to vector<16x256xf32>
    %77 = arith.addf %75, %76 : vector<16x256xf32>
    %cst_32 = arith.constant 0.000000e+00 : f32
    %78 = vector.broadcast %cst_32 : f32 to vector<16x256xf32>
    %79 = arith.cmpf ogt, %77, %78 : vector<16x256xf32>
    %cst_33 = arith.constant 0.00999999977 : f32
    %80 = vector.broadcast %cst_33 : f32 to vector<16x256xf32>
    %81 = arith.mulf %80, %77 : vector<16x256xf32>
    %82 = arith.select %79, %77, %81 : vector<16x256xi1>, vector<16x256xf32>
    %83 = arith.truncf %82 : vector<16x256xf32> to vector<16x256xbf16>
    %cst_34 = arith.constant dense<0.000000e+00> : vector<16x128xf32>
    %84 = tpu.matmul %83, %4, %cst_34 {dimension_numbers = #tpu.dot_dimension_numbers<[1], [0], [0], [1], [0, 0, 1, 1], [], []>} : vector<16x256xbf16>, vector<256x128xbf16>, vector<16x128xf32> -> vector<16x128xf32>
    %85 = vector.broadcast %11 : vector<1x128xf32> to vector<16x128xf32>
    %86 = arith.addf %84, %85 : vector<16x128xf32>
    %cst_35 = arith.constant 0.000000e+00 : f32
    %87 = vector.broadcast %cst_35 : f32 to vector<16x128xf32>
    %88 = arith.maximumf %86, %87 : vector<16x128xf32>
    %89 = arith.truncf %88 : vector<16x128xf32> to vector<16x128xbf16>
    %cst_36 = arith.constant dense<0.000000e+00> : vector<16x128xf32>
    %90 = tpu.matmul %89, %5, %cst_36 {dimension_numbers = #tpu.dot_dimension_numbers<[1], [0], [0], [1], [0, 0, 1, 1], [], []>} : vector<16x128xbf16>, vector<128x128xbf16>, vector<16x128xf32> -> vector<16x128xf32>
    %91 = vector.broadcast %12 : vector<1x128xf32> to vector<16x128xf32>
    %92 = arith.addf %90, %91 : vector<16x128xf32>
    %cst_37 = arith.constant 0.000000e+00 : f32
    %93 = vector.broadcast %cst_37 : f32 to vector<16x128xf32>
    %94 = arith.maximumf %92, %93 : vector<16x128xf32>
    %95 = arith.truncf %94 : vector<16x128xf32> to vector<16x128xbf16>
    %cst_38 = arith.constant dense<0.000000e+00> : vector<16x128xf32>
    %96 = tpu.matmul %95, %6, %cst_38 {dimension_numbers = #tpu.dot_dimension_numbers<[1], [0], [0], [1], [0, 0, 1, 1], [], []>} : vector<16x128xbf16>, vector<128x128xbf16>, vector<16x128xf32> -> vector<16x128xf32>
    %97 = vector.broadcast %13 : vector<1x128xf32> to vector<16x128xf32>
    %98 = arith.addf %96, %97 : vector<16x128xf32>
    %c0_39 = arith.constant 0 : index
    %c0_40 = arith.constant 0 : index
    %99 = vector.load %arg8[%c0_39, %c0_40] : memref<16x128xf32, #tpu.memory_space<vmem>>, vector<16x128xf32>
    tpu.vector_store %arg8[%c0_39, %c0_40], %98 {strides = array<i32>} : memref<16x128xf32, #tpu.memory_space<vmem>>, vector<16x128xf32>,
    return
  }
}

</mosaic_0001>

<llo_original>
// kernel: gat_localization_forward.1
$region0: #{gat_localization_forward.1}
  #allocation0 [shape = 'u32[]', space=smem, size = 0x4, offset = 0x4, fixed_abs, tag = 'smem constant byte address 0x4 - core index']
  #allocation1 [shape = 'u32[144,128]{1,0:T(1,128)}', space=vmem, size = 0x12000, scoped, tag = 'internal scratch']
  %s0 = inlined_call_operand.vmem [shape: f32[16,256], index: 0, kind: input, shape index: {}]
  %s1 = inlined_call_operand.hbm [shape: bf16[16,16], index: 1, kind: input, shape index: {}]
  %s2 = inlined_call_operand.hbm [shape: bf16[256,256], index: 2, kind: input, shape index: {}]
  %s3 = inlined_call_operand.hbm [shape: bf16[256,256], index: 3, kind: input, shape index: {}]
  %s4 = inlined_call_operand.hbm [shape: bf16[256,128], index: 4, kind: input, shape index: {}]
  %s5 = inlined_call_operand.vmem [shape: bf16[128,128], index: 5, kind: input, shape index: {}]
  %s6 = inlined_call_operand.hbm [shape: bf16[128,128], index: 6, kind: input, shape index: {}]
  %s7 = inlined_call_operand.vmem [shape: f32[8,256], index: 7, kind: input, shape index: {}]
  %s8 = inlined_call_operand.vmem [shape: f32[16,128], index: 8, kind: output, shape index: {}]
  %s9 = sld [smem:[#allocation0]]
  $region62: #{gat_localization_forward.1} parent=0
    _
  %s11 = ssub.s32 1, %s9
  %s12 = scalar_select 0, %s11, %s9
  $region1: #{gat_localization_forward.1} parent=0
    #allocation2 [shape = 'u8[4096]{0}', space=vmem, size = 0x1000, scoped, tag = 'input window, operand 1, single buffered']
    #allocation3 [shape = 's32[1]{0}', space=sflag, size = 0x4, scoped, tag = 'scoped memory for gat_localization_forward.1']
    #allocation4 [shape = 'u8[131072]{0}', space=vmem, size = 0x20000, scoped, tag = 'input window, operand 2, single buffered']
    #allocation5 [shape = 's32[1]{0}', space=sflag, size = 0x4, scoped, tag = 'scoped memory for gat_localization_forward.1']
    #allocation6 [shape = 'u8[131072]{0}', space=vmem, size = 0x20000, scoped, tag = 'input window, operand 3, single buffered']
    #allocation7 [shape = 'u8[65536]{0}', space=vmem, size = 0x10000, scoped, tag = 'input window, operand 4, single buffered']
    #allocation8 [shape = 's32[1]{0}', space=sflag, size = 0x4, scoped, tag = 'scoped memory for gat_localization_forward.1']
    #allocation9 [shape = 'u8[32768]{0}', space=vmem, size = 0x8000, scoped, tag = 'input window, operand 6, single buffered']
    %13 = vsyncpa [#allocation3], 0
    %14 = vsyncpa [#allocation5], 0
    %15 = vsyncpa [#allocation8], 0
    // Predicated region
    $region2: #{gat_localization_forward.1} parent=1 // pred_check
      _
    $region3: #{gat_localization_forward.1} parent=1 // pred_check_branch
      %17 = sbr.rel (0) target = $region5
    $region4: #{gat_localization_forward.1} parent=1 // pred_region
      _
    $region5: #{gat_localization_forward.1} parent=1 // pred_fallthru
      _
    // Predicated region
    $region6: #{gat_localization_forward.1} parent=1 // pred_check
      _
    $region7: #{gat_localization_forward.1} parent=1 // pred_check_branch
      %19 = sbr.rel (0) target = $region9
    $region8: #{gat_localization_forward.1} parent=1 // pred_region
      %s21 = ssub.s32 128, 128
      %22 = vsyncadd [#allocation3], %s21
      %s23 = sshll.u32 [#allocation2], 4
      %s24 = int_to_ptr.vmem [resolvable:$true] %s23
      %29 = dma.hbm_to_vmem [thread:$0]  %s1, 128, %s24, [#allocation3], 64, 64, 4
    $region9: #{gat_localization_forward.1} parent=1 // pred_fallthru
      _
    // Predicated region
    $region10: #{gat_localization_forward.1} parent=1 // pred_check
      _
    $region11: #{gat_localization_forward.1} parent=1 // pred_check_branch
      %31 = sbr.rel (0) target = $region13
    $region12: #{gat_localization_forward.1} parent=1 // pred_region
      %s33 = ssub.s32 4096, 4096
      %34 = vsyncadd [#allocation5], %s33
      %s35 = sshll.u32 [#allocation4], 4
      %s36 = int_to_ptr.vmem [resolvable:$true] %s35
      %41 = dma.hbm_to_vmem [thread:$0]  %s2, 4096, %s36, [#allocation5], 128, 128, 8
    $region13: #{gat_localization_forward.1} parent=1 // pred_fallthru
      _
    // Predicated region
    $region14: #{gat_localization_forward.1} parent=1 // pred_check
      _
    $region15: #{gat_localization_forward.1} parent=1 // pred_check_branch
      %43 = sbr.rel (0) target = $region17
    $region16: #{gat_localization_forward.1} parent=1 // pred_region
      %s45 = ssub.s32 4096, 4096
      %46 = vsyncadd [#allocation5], %s45
      %s47 = sshll.u32 [#allocation6], 4
      %s48 = int_to_ptr.vmem [resolvable:$true] %s47
      %53 = dma.hbm_to_vmem [thread:$0]  %s3, 4096, %s48, [#allocation5], 128, 128, 8
    $region17: #{gat_localization_forward.1} parent=1 // pred_fallthru
      _
    // Predicated region
    $region18: #{gat_localization_forward.1} parent=1 // pred_check
      _
    $region19: #{gat_localization_forward.1} parent=1 // pred_check_branch
      %55 = sbr.rel (0) target = $region21
    $region20: #{gat_localization_forward.1} parent=1 // pred_region
      %s57 = ssub.s32 2048, 2048
      %58 = vsyncadd [#allocation8], %s57
      %s59 = sshll.u32 [#allocation7], 4
      %s60 = int_to_ptr.vmem [resolvable:$true] %s59
      %65 = dma.hbm_to_vmem [thread:$0]  %s4, 2048, %s60, [#allocation8], 64, 64, 4
    $region21: #{gat_localization_forward.1} parent=1 // pred_fallthru
      _
    // Predicated region
    $region22: #{gat_localization_forward.1} parent=1 // pred_check
      _
    $region23: #{gat_localization_forward.1} parent=1 // pred_check_branch
      %67 = sbr.rel (0) target = $region25
    $region24: #{gat_localization_forward.1} parent=1 // pred_region
      _
    $region25: #{gat_localization_forward.1} parent=1 // pred_fallthru
      _
    // Predicated region
    $region26: #{gat_localization_forward.1} parent=1 // pred_check
      _
    $region27: #{gat_localization_forward.1} parent=1 // pred_check_branch
      %69 = sbr.rel (0) target = $region29
    $region28: #{gat_localization_forward.1} parent=1 // pred_region
      %s71 = ssub.s32 1024, 1024
      %72 = vsyncadd [#allocation8], %s71
      %s73 = sshll.u32 [#allocation9], 4
      %s74 = int_to_ptr.vmem [resolvable:$true] %s73
      %79 = dma.hbm_to_vmem [thread:$0]  %s6, 1024, %s74, [#allocation8], 64, 64, 4
    $region29: #{gat_localization_forward.1} parent=1 // pred_fallthru
      _
    // Predicated region
    $region30: #{gat_localization_forward.1} parent=1 // pred_check
      _
    $region31: #{gat_localization_forward.1} parent=1 // pred_check_branch
      %81 = sbr.rel (0) target = $region33
    $region32: #{gat_localization_forward.1} parent=1 // pred_region
      _
    $region33: #{gat_localization_forward.1} parent=1 // pred_fallthru
      _
    // Predicated region
    $region34: #{gat_localization_forward.1} parent=1 // pred_check
      _
    $region35: #{gat_localization_forward.1} parent=1 // pred_check_branch
      %83 = sbr.rel (0) target = $region37
    $region36: #{gat_localization_forward.1} parent=1 // pred_region
      %84 = dma.done [#allocation3], 128
    $region37: #{gat_localization_forward.1} parent=1 // pred_fallthru
      _
    // Predicated region
    $region38: #{gat_localization_forward.1} parent=1 // pred_check
      _
    $region39: #{gat_localization_forward.1} parent=1 // pred_check_branch
      %86 = sbr.rel (0) target = $region41
    $region40: #{gat_localization_forward.1} parent=1 // pred_region
      %87 = dma.done [#allocation5], 4096
    $region41: #{gat_localization_forward.1} parent=1 // pred_fallthru
      _
    // Predicated region
    $region42: #{gat_localization_forward.1} parent=1 // pred_check
      _
    $region43: #{gat_localization_forward.1} parent=1 // pred_check_branch
      %89 = sbr.rel (0) target = $region45
    $region44: #{gat_localization_forward.1} parent=1 // pred_region
      %90 = dma.done [#allocation5], 4096
    $region45: #{gat_localization_forward.1} parent=1 // pred_fallthru
      _
    // Predicated region
    $region46: #{gat_localization_forward.1} parent=1 // pred_check
      _
    $region47: #{gat_localization_forward.1} parent=1 // pred_check_branch
      %92 = sbr.rel (0) target = $region49
    $region48: #{gat_localization_forward.1} parent=1 // pred_region
      %93 = dma.done [#allocation8], 2048
    $region49: #{gat_localization_forward.1} parent=1 // pred_fallthru
      _
    // Predicated region
    $region50: #{gat_localization_forward.1} parent=1 // pred_check
      _
    $region51: #{gat_localization_forward.1} parent=1 // pred_check_branch
      %95 = sbr.rel (0) target = $region53
    $region52: #{gat_localization_forward.1} parent=1 // pred_region
      %96 = dma.done [#allocation8], 1024
    $region53: #{gat_localization_forward.1} parent=1 // pred_fallthru
      _
    %v98 = vld [vmem:[%s0] sm:$0xff]
    %v99 = vld [vmem:[%s0 + $0x8] sm:$0xff]
    %v100 = vld [vmem:[%s0 + $0x10] sm:$0xff]
    %v101 = vld [vmem:[%s0 + $0x18] sm:$0xff]
    %v102 = vld [vmem:[#allocation2] sm:$0xf]
    %v103 = vld [vmem:[#allocation2 + $0x4] sm:$0xf]
    %v104 = vld [vmem:[#allocation4] sm:$0xff]
    %v105 = vld [vmem:[#allocation4 + $0x8] sm:$0xff]
    %v106 = vld [vmem:[#allocation4 + $0x10] sm:$0xff]
    %v107 = vld [vmem:[#allocation4 + $0x18] sm:$0xff]
    %v108 = vld [vmem:[#allocation4 + $0x20] sm:$0xff]
    %v109 = vld [vmem:[#allocation4 + $0x28] sm:$0xff]
    %v110 = vld [vmem:[#allocation4 + $0x30] sm:$0xff]
    %v111 = vld [vmem:[#allocation4 + $0x38] sm:$0xff]
    %v112 = vld [vmem:[#allocation4 + $0x40] sm:$0xff]
    %v113 = vld [vmem:[#allocation4 + $0x48] sm:$0xff]
    %v114 = vld [vmem:[#allocation4 + $0x50] sm:$0xff]
    %v115 = vld [vmem:[#allocation4 + $0x58] sm:$0xff]
    %v116 = vld [vmem:[#allocation4 + $0x60] sm:$0xff]
    %v117 = vld [vmem:[#allocation4 + $0x68] sm:$0xff]
    %v118 = vld [vmem:[#allocation4 + $0x70] sm:$0xff]
    %v119 = vld [vmem:[#allocation4 + $0x78] sm:$0xff]
    %v120 = vld [vmem:[#allocation4 + $0x80] sm:$0xff]
    %v121 = vld [vmem:[#allocation4 + $0x88] sm:$0xff]
    %v122 = vld [vmem:[#allocation4 + $0x90] sm:$0xff]
    %v123 = vld [vmem:[#allocation4 + $0x98] sm:$0xff]
    %v124 = vld [vmem:[#allocation4 + $0xa0] sm:$0xff]
    %v125 = vld [vmem:[#allocation4 + $0xa8] sm:$0xff]
    %v126 = vld [vmem:[#allocation4 + $0xb0] sm:$0xff]
    %v127 = vld [vmem:[#allocation4 + $0xb8] sm:$0xff]
    %v128 = vld [vmem:[#allocation4 + $0xc0] sm:$0xff]
    %v129 = vld [vmem:[#allocation4 + $0xc8] sm:$0xff]
    %v130 = vld [vmem:[#allocation4 + $0xd0] sm:$0xff]
    %v131 = vld [vmem:[#allocation4 + $0xd8] sm:$0xff]
    %v132 = vld [vmem:[#allocation4 + $0xe0] sm:$0xff]
    %v133 = vld [vmem:[#allocation4 + $0xe8] sm:$0xff]
    %v134 = vld [vmem:[#allocation4 + $0xf0] sm:$0xff]
    %v135 = vld [vmem:[#allocation4 + $0xf8] sm:$0xff]
    %v136 = vld [vmem:[#allocation6] sm:$0xff]
    %v137 = vld [vmem:[#allocation6 + $0x8] sm:$0xff]
    %v138 = vld [vmem:[#allocation6 + $0x10] sm:$0xff]
    %v139 = vld [vmem:[#allocation6 + $0x18] sm:$0xff]
    %v140 = vld [vmem:[#allocation6 + $0x20] sm:$0xff]
    %v141 = vld [vmem:[#allocation6 + $0x28] sm:$0xff]
    %v142 = vld [vmem:[#allocation6 + $0x30] sm:$0xff]
    %v143 = vld [vmem:[#allocation6 + $0x38] sm:$0xff]
    %v144 = vld [vmem:[#allocation6 + $0x40] sm:$0xff]
    %v145 = vld [vmem:[#allocation6 + $0x48] sm:$0xff]
    %v146 = vld [vmem:[#allocation6 + $0x50] sm:$0xff]
    %v147 = vld [vmem:[#allocation6 + $0x58] sm:$0xff]
    %v148 = vld [vmem:[#allocation6 + $0x60] sm:$0xff]
    %v149 = vld [vmem:[#allocation6 + $0x68] sm:$0xff]
    %v150 = vld [vmem:[#allocation6 + $0x70] sm:$0xff]
    %v151 = vld [vmem:[#allocation6 + $0x78] sm:$0xff]
    %v152 = vld [vmem:[#allocation6 + $0x80] sm:$0xff]
    %v153 = vld [vmem:[#allocation6 + $0x88] sm:$0xff]
    %v154 = vld [vmem:[#allocation6 + $0x90] sm:$0xff]
    %v155 = vld [vmem:[#allocation6 + $0x98] sm:$0xff]
    %v156 = vld [vmem:[#allocation6 + $0xa0] sm:$0xff]
    %v157 = vld [vmem:[#allocation6 + $0xa8] sm:$0xff]
    %v158 = vld [vmem:[#allocation6 + $0xb0] sm:$0xff]
    %v159 = vld [vmem:[#allocation6 + $0xb8] sm:$0xff]
    %v160 = vld [vmem:[#allocation6 + $0xc0] sm:$0xff]
    %v161 = vld [vmem:[#allocation6 + $0xc8] sm:$0xff]
    %v162 = vld [vmem:[#allocation6 + $0xd0] sm:$0xff]
    %v163 = vld [vmem:[#allocation6 + $0xd8] sm:$0xff]
    %v164 = vld [vmem:[#allocation6 + $0xe0] sm:$0xff]
    %v165 = vld [vmem:[#allocation6 + $0xe8] sm:$0xff]
    %v166 = vld [vmem:[#allocation6 + $0xf0] sm:$0xff]
    %v167 = vld [vmem:[#allocation6 + $0xf8] sm:$0xff]
    %v168 = vld [vmem:[#allocation7] sm:$0xf]
    %v169 = vld [vmem:[#allocation7 + $0x4] sm:$0xf]
    %v170 = vld [vmem:[#allocation7 + $0x8] sm:$0xf]
    %v171 = vld [vmem:[#allocation7 + $0xc] sm:$0xf]
    %v172 = vld [vmem:[#allocation7 + $0x10] sm:$0xf]
    %v173 = vld [vmem:[#allocation7 + $0x14] sm:$0xf]
    %v174 = vld [vmem:[#allocation7 + $0x18] sm:$0xf]
    %v175 = vld [vmem:[#allocation7 + $0x1c] sm:$0xf]
    %v176 = vld [vmem:[#allocation7 + $0x20] sm:$0xf]
    %v177 = vld [vmem:[#allocation7 + $0x24] sm:$0xf]
    %v178 = vld [vmem:[#allocation7 + $0x28] sm:$0xf]
    %v179 = vld [vmem:[#allocation7 + $0x2c] sm:$0xf]
    %v180 = vld [vmem:[#allocation7 + $0x30] sm:$0xf]
    %v181 = vld [vmem:[#allocation7 + $0x34] sm:$0xf]
    %v182 = vld [vmem:[#allocation7 + $0x38] sm:$0xf]
    %v183 = vld [vmem:[#allocation7 + $0x3c] sm:$0xf]
    %v184 = vld [vmem:[#allocation7 + $0x40] sm:$0xf]
    %v185 = vld [vmem:[#allocation7 + $0x44] sm:$0xf]
    %v186 = vld [vmem:[#allocation7 + $0x48] sm:$0xf]
    %v187 = vld [vmem:[#allocation7 + $0x4c] sm:$0xf]
    %v188 = vld [vmem:[#allocation7 + $0x50] sm:$0xf]
    %v189 = vld [vmem:[#allocation7 + $0x54] sm:$0xf]
    %v190 = vld [vmem:[#allocation7 + $0x58] sm:$0xf]
    %v191 = vld [vmem:[#allocation7 + $0x5c] sm:$0xf]
    %v192 = vld [vmem:[#allocation7 + $0x60] sm:$0xf]
    %v193 = vld [vmem:[#allocation7 + $0x64] sm:$0xf]
    %v194 = vld [vmem:[#allocation7 + $0x68] sm:$0xf]
    %v195 = vld [vmem:[#allocation7 + $0x6c] sm:$0xf]
    %v196 = vld [vmem:[#allocation7 + $0x70] sm:$0xf]
    %v197 = vld [vmem:[#allocation7 + $0x74] sm:$0xf]
    %v198 = vld [vmem:[#allocation7 + $0x78] sm:$0xf]
    %v199 = vld [vmem:[#allocation7 + $0x7c] sm:$0xf]
    %v200 = vld [vmem:[%s5] sm:$0xf]
    %v201 = vld [vmem:[%s5 + $0x4] sm:$0xf]
    %v202 = vld [vmem:[%s5 + $0x8] sm:$0xf]
    %v203 = vld [vmem:[%s5 + $0xc] sm:$0xf]
    %v204 = vld [vmem:[%s5 + $0x10] sm:$0xf]
    %v205 = vld [vmem:[%s5 + $0x14] sm:$0xf]
    %v206 = vld [vmem:[%s5 + $0x18] sm:$0xf]
    %v207 = vld [vmem:[%s5 + $0x1c] sm:$0xf]
    %v208 = vld [vmem:[%s5 + $0x20] sm:$0xf]
    %v209 = vld [vmem:[%s5 + $0x24] sm:$0xf]
    %v210 = vld [vmem:[%s5 + $0x28] sm:$0xf]
    %v211 = vld [vmem:[%s5 + $0x2c] sm:$0xf]
    %v212 = vld [vmem:[%s5 + $0x30] sm:$0xf]
    %v213 = vld [vmem:[%s5 + $0x34] sm:$0xf]
    %v214 = vld [vmem:[%s5 + $0x38] sm:$0xf]
    %v215 = vld [vmem:[%s5 + $0x3c] sm:$0xf]
    %v216 = vld [vmem:[#allocation9] sm:$0xf]
    %v217 = vld [vmem:[#allocation9 + $0x4] sm:$0xf]
    %v218 = vld [vmem:[#allocation9 + $0x8] sm:$0xf]
    %v219 = vld [vmem:[#allocation9 + $0xc] sm:$0xf]
    %v220 = vld [vmem:[#allocation9 + $0x10] sm:$0xf]
    %v221 = vld [vmem:[#allocation9 + $0x14] sm:$0xf]
    %v222 = vld [vmem:[#allocation9 + $0x18] sm:$0xf]
    %v223 = vld [vmem:[#allocation9 + $0x1c] sm:$0xf]
    %v224 = vld [vmem:[#allocation9 + $0x20] sm:$0xf]
    %v225 = vld [vmem:[#allocation9 + $0x24] sm:$0xf]
    %v226 = vld [vmem:[#allocation9 + $0x28] sm:$0xf]
    %v227 = vld [vmem:[#allocation9 + $0x2c] sm:$0xf]
    %v228 = vld [vmem:[#allocation9 + $0x30] sm:$0xf]
    %v229 = vld [vmem:[#allocation9 + $0x34] sm:$0xf]
    %v230 = vld [vmem:[#allocation9 + $0x38] sm:$0xf]
    %v231 = vld [vmem:[#allocation9 + $0x3c] sm:$0xf]
    %v232 = vld [vmem:[%s7] sm:$0xff]
    %v233 = vld [vmem:[%s7 + $0x8] sm:$0xff]
    %v234 = vunpack.c.l.bf16 %v102
    %v235 = vunpack.c.l.bf16 %v103
    %v236 = vpack.c.bf16 %v100, %v98
    %v237 = vpack.c.bf16 %v101, %v99
    %v270 = vunpack.c.l.b16 %v104
    %v271 = vunpack.c.h.b16 %v104
    %v272 = vunpack.c.l.b16 %v105
    %v273 = vunpack.c.h.b16 %v105
    %v274 = vunpack.c.l.b16 %v106
    %v275 = vunpack.c.h.b16 %v106
    %v276 = vunpack.c.l.b16 %v107
    %v277 = vunpack.c.h.b16 %v107
    %v278 = vunpack.c.l.b16 %v108
    %v279 = vunpack.c.h.b16 %v108
    %v280 = vunpack.c.l.b16 %v109
    %v281 = vunpack.c.h.b16 %v109
    %v282 = vunpack.c.l.b16 %v110
    %v283 = vunpack.c.h.b16 %v110
    %v284 = vunpack.c.l.b16 %v111
    %v285 = vunpack.c.h.b16 %v111
    %v286 = vunpack.c.l.b16 %v112
    %v287 = vunpack.c.h.b16 %v112
    %v288 = vunpack.c.l.b16 %v113
    %v289 = vunpack.c.h.b16 %v113
    %v290 = vunpack.c.l.b16 %v114
    %v291 = vunpack.c.h.b16 %v114
    %v292 = vunpack.c.l.b16 %v115
    %v293 = vunpack.c.h.b16 %v115
    %v294 = vunpack.c.l.b16 %v116
    %v295 = vunpack.c.h.b16 %v116
    %v296 = vunpack.c.l.b16 %v117
    %v297 = vunpack.c.h.b16 %v117
    %v298 = vunpack.c.l.b16 %v118
    %v299 = vunpack.c.h.b16 %v118
    %v300 = vunpack.c.l.b16 %v119
    %v301 = vunpack.c.h.b16 %v119
    %v302 = vunpack.c.l.b16 %v120
    %v303 = vunpack.c.h.b16 %v120
    %v304 = vunpack.c.l.b16 %v121
    %v305 = vunpack.c.h.b16 %v121
    %v306 = vunpack.c.l.b16 %v122
    %v307 = vunpack.c.h.b16 %v122
    %v308 = vunpack.c.l.b16 %v123
    %v309 = vunpack.c.h.b16 %v123
    %v310 = vunpack.c.l.b16 %v124
    %v311 = vunpack.c.h.b16 %v124
    %v312 = vunpack.c.l.b16 %v125
    %v313 = vunpack.c.h.b16 %v125
    %v314 = vunpack.c.l.b16 %v126
    %v315 = vunpack.c.h.b16 %v126
    %v316 = vunpack.c.l.b16 %v127
    %v317 = vunpack.c.h.b16 %v127
    %v318 = vunpack.c.l.b16 %v128
    %v319 = vunpack.c.h.b16 %v128
    %v320 = vunpack.c.l.b16 %v129
    %v321 = vunpack.c.h.b16 %v129
    %v322 = vunpack.c.l.b16 %v130
    %v323 = vunpack.c.h.b16 %v130
    %v324 = vunpack.c.l.b16 %v131
    %v325 = vunpack.c.h.b16 %v131
    %v326 = vunpack.c.l.b16 %v132
    %v327 = vunpack.c.h.b16 %v132
    %v328 = vunpack.c.l.b16 %v133
    %v329 = vunpack.c.h.b16 %v133
    %v330 = vunpack.c.l.b16 %v134
    %v331 = vunpack.c.h.b16 %v134
    %v332 = vunpack.c.l.b16 %v135
    %v333 = vunpack.c.h.b16 %v135
    %v334 = vpack.c.b16 %v272, %v270
    %v335 = vpack.c.b16 %v273, %v271
    %v336 = vpack.c.b16 %v276, %v274
    %v337 = vpack.c.b16 %v277, %v275
    %v338 = vpack.c.b16 %v280, %v278
    %v339 = vpack.c.b16 %v281, %v279
    %v340 = vpack.c.b16 %v284, %v282
    %v341 = vpack.c.b16 %v285, %v283
    %v342 = vpack.c.b16 %v288, %v286
    %v343 = vpack.c.b16 %v289, %v287
    %v344 = vpack.c.b16 %v292, %v290
    %v345 = vpack.c.b16 %v293, %v291
    %v346 = vpack.c.b16 %v296, %v294
    %v347 = vpack.c.b16 %v297, %v295
    %v348 = vpack.c.b16 %v300, %v298
    %v349 = vpack.c.b16 %v301, %v299
    %v350 = vpack.c.b16 %v304, %v302
    %v351 = vpack.c.b16 %v305, %v303
    %v352 = vpack.c.b16 %v308, %v306
    %v353 = vpack.c.b16 %v309, %v307
    %v354 = vpack.c.b16 %v312, %v310
    %v355 = vpack.c.b16 %v313, %v311
    %v356 = vpack.c.b16 %v316, %v314
    %v357 = vpack.c.b16 %v317, %v315
    %v358 = vpack.c.b16 %v320, %v318
    %v359 = vpack.c.b16 %v321, %v319
    %v360 = vpack.c.b16 %v324, %v322
    %v361 = vpack.c.b16 %v325, %v323
    %v362 = vpack.c.b16 %v328, %v326
    %v363 = vpack.c.b16 %v329, %v327
    %v364 = vpack.c.b16 %v332, %v330
    %v365 = vpack.c.b16 %v333, %v331
    %398 = vmatprep.subr.bf16.mxu0 %v335
    %399 = vmatpush1.bf16.msra.mxu0 %v334
    %400 = vmatprep.subr.bf16.mxu0 %v337
    %401 = vmatpush1.bf16.msra.mxu0 %v336
    %402 = vmatprep.subr.bf16.mxu0 %v339
    %403 = vmatpush1.bf16.msra.mxu0 %v338
    %404 = vmatprep.subr.bf16.mxu0 %v341
    %405 = vmatpush1.bf16.msra.mxu0 %v340
    %406 = vmatprep.subr.bf16.mxu0 %v343
    %407 = vmatpush1.bf16.msra.mxu0 %v342
    %408 = vmatprep.subr.bf16.mxu0 %v345
    %409 = vmatpush1.bf16.msra.mxu0 %v344
    %410 = vmatprep.subr.bf16.mxu0 %v347
    %411 = vmatpush1.bf16.msra.mxu0 %v346
    %412 = vmatprep.subr.bf16.mxu0 %v349
    %413 = vmatpush1.bf16.msra.mxu0 %v348
    %414 = vmatprep.subr.bf16.mxu0 %v351
    %415 = vmatpush1.bf16.msra.mxu0 %v350
    %416 = vmatprep.subr.bf16.mxu0 %v353
    %417 = vmatpush1.bf16.msra.mxu0 %v352
    %418 = vmatprep.subr.bf16.mxu0 %v355
    %419 = vmatpush1.bf16.msra.mxu0 %v354
    %420 = vmatprep.subr.bf16.mxu0 %v357
    %421 = vmatpush1.bf16.msra.mxu0 %v356
    %422 = vmatprep.subr.bf16.mxu0 %v359
    %423 = vmatpush1.bf16.msra.mxu0 %v358
    %424 = vmatprep.subr.bf16.mxu0 %v361
    %425 = vmatpush1.bf16.msra.mxu0 %v360
    %426 = vmatprep.subr.bf16.mxu0 %v363
    %427 = vmatpush1.bf16.msra.mxu0 %v362
    %428 = vmatprep.subr.bf16.mxu0 %v365
    %429 = vmatpush1.bf16.msra.mxu0 %v364
    %430 = vmatprep.mubr.bf16.mxu0 %v237
    %431 = vmatmul.mubr.bf16.gmra.mrb[0].mxu0 %v236
    %v432 = vpop.f32.mrb[0].mxu0
    %v433 = vadd.f32 0.0, %v432
    %v434 = vpop.f32.mrb[0].mxu0
    %v435 = vadd.f32 0.0, %v434
    %v436 = vpop.f32.mrb[0].mxu0
    %v437 = vadd.f32 0.0, %v436
    %v438 = vpop.f32.mrb[0].mxu0
    %v439 = vadd.f32 0.0, %v438
    %440 = vdwg.mxu0
    %v441 = vlaneseq
    %v442 = vshrl.u32 %v441, 7
    %v443 = vsub.s32 7, %v442
    %v444 = vrot.slane %v232, %v443
    %v445 = vlaneseq
    %v446 = vshrl.u32 %v445, 7
    %v447 = vsub.s32 7, %v446
    %v448 = vrot.slane %v233, %v447
    %v449 = vmul.f32 %v433, %v444
    %v450 = vmul.f32 %v435, %v448
    %v451 = vmul.f32 %v437, %v444
    %v452 = vmul.f32 %v439, %v448
    %v453 = vadd.f32 %v449, %v450
    %454 = vadd.xlane.f32.xlu0 %v453
    %v455 = vpop.xlane.xlu0 %454
    %v456 = vadd.f32 %v451, %v452
    %457 = vadd.xlane.f32.xlu0 %v456
    %v458 = vpop.xlane.xlu0 %457
    %v461 = vrot.slane %v232, 5
    %v462 = vrot.slane %v233, 5
    %465 = vmatprep.subr.mxu0 %v435
    %466 = vmatpush1.xpose.msra.mxu0 %v433
    %467 = vmatprep.subr.mxu0 %v439
    %468 = vmatpush1.xpose.msra.mxu0 %v437
    %469 = vmatprep.subr.mxu0 0.0
    %470 = vmatpush1.xpose.msra.mxu0 0.0
    %471 = vmatprep.subr.mxu0 0.0
    %472 = vmatpush1.xpose.msra.mxu0 0.0
    %473 = vmatprep.subr.mxu0 0.0
    %474 = vmatpush1.xpose.msra.mxu0 0.0
    %475 = vmatprep.subr.mxu0 0.0
    %476 = vmatpush1.xpose.msra.mxu0 0.0
    %477 = vmatprep.subr.mxu0 0.0
    %478 = vmatpush1.xpose.msra.mxu0 0.0
    %479 = vmatprep.subr.mxu0 0.0
    %480 = vmatpush1.xpose.msra.mxu0 0.0
    %481 = vmatprep.subr.mxu0 0.0
    %482 = vmatpush1.xpose.msra.mxu0 0.0
    %483 = vmatprep.subr.mxu0 0.0
    %484 = vmatpush1.xpose.msra.mxu0 0.0
    %485 = vmatprep.subr.mxu0 0.0
    %486 = vmatpush1.xpose.msra.mxu0 0.0
    %487 = vmatprep.subr.mxu0 0.0
    %488 = vmatpush1.xpose.msra.mxu0 0.0
    %489 = vmatprep.subr.mxu0 0.0
    %490 = vmatpush1.xpose.msra.mxu0 0.0
    %491 = vmatprep.subr.mxu0 0.0
    %492 = vmatpush1.xpose.msra.mxu0 0.0
    %493 = vmatprep.subr.mxu0 0.0
    %494 = vmatpush1.xpose.msra.mxu0 0.0
    %495 = vmatprep.subr.mxu0 0.0
    %496 = vmatpush1.xpose.msra.mxu0 0.0
    %497 = vmatprep.subr.mxu0 0.0
    %498 = vmatpush1.xpose.msra.mxu0 0.0
    %499 = vmatprep.subr.mxu0 0.0
    %500 = vmatpush1.xpose.msra.mxu0 0.0
    %501 = vmatprep.subr.mxu0 0.0
    %502 = vmatpush1.xpose.msra.mxu0 0.0
    %503 = vmatprep.subr.mxu0 0.0
    %504 = vmatpush1.xpose.msra.mxu0 0.0
    %505 = vmatprep.subr.mxu0 0.0
    %506 = vmatpush1.xpose.msra.mxu0 0.0
    %507 = vmatprep.subr.mxu0 0.0
    %508 = vmatpush1.xpose.msra.mxu0 0.0
    %509 = vmatprep.subr.mxu0 0.0
    %510 = vmatpush1.xpose.msra.mxu0 0.0
    %511 = vmatprep.subr.mxu0 0.0
    %512 = vmatpush1.xpose.msra.mxu0 0.0
    %513 = vmatprep.subr.mxu0 0.0
    %514 = vmatpush1.xpose.msra.mxu0 0.0
    %515 = vmatprep.subr.mxu0 0.0
    %516 = vmatpush1.xpose.msra.mxu0 0.0
    %517 = vmatprep.subr.mxu0 0.0
    %518 = vmatpush1.xpose.msra.mxu0 0.0
    %519 = vmatprep.subr.mxu0 0.0
    %520 = vmatpush1.xpose.msra.mxu0 0.0
    %521 = vmatprep.subr.mxu0 0.0
    %522 = vmatpush1.xpose.msra.mxu0 0.0
    %523 = vmatprep.subr.mxu0 0.0
    %524 = vmatpush1.xpose.msra.mxu0 0.0
    %525 = vmatprep.subr.mxu0 0.0
    %526 = vmatpush1.xpose.msra.mxu0 0.0
    %527 = vmatprep.subr.mxu0 0.0
    %528 = vmatpush1.xpose.msra.mxu0 0.0
    %529 = vmatprep.mubr.f32.mxu0 %v462
    %530 = vmatmul.mubr.f32.gmra.mrb[0].mxu0 %v461
    %v531 = vpop.f32.mrb[0].mxu0
    %v532 = vadd.f32 0.0, %v531
    %v533 = vpop.f32.mrb[0].mxu0
    %534 = vdwg.mxu0
    %v535 = vlaneseq
    %v536 = vshrl.u32 %v535, 7
    %v537 = vsub.s32 0, %v536
    %v538 = vrot.slane %v532, %v537
    %v539 = vadd.f32 %v455, %v538
    %v540 = vadd.f32 %v458, %v538
    %vm541 = vcmp.gt.f32.partialorder %v539, 0.0
    %vm542 = vcmp.gt.f32.partialorder %v540, 0.0
    %v543 = vmul.f32 %v539, 0.2
    %v544 = vmul.f32 %v540, 0.2
    %v545 = vsel %vm541, %v539, %v543
    %v546 = vsel %vm542, %v540, %v544
    %v547 = vadd.f32 %v545, %v234
    %v548 = vadd.f32 %v546, %v235
    %vm549 = vcmask 130048
    %v550 = vsel %vm549, %v547, -inf
    %551 = vmax.xlane.f32.xlu0 %v550
    %v552 = vpop.xlane.xlu0 %551
    %v553 = vsel %vm549, %v548, -inf
    %554 = vmax.xlane.f32.xlu0 %v553
    %v555 = vpop.xlane.xlu0 %554
    %v556 = vsub.f32 %v547, %v552
    %v557 = vsub.f32 %v548, %v555
    %v558 = vmul.f32 %v556, 1.442695
    %v559 = vpow.pop %v558
    %v560 = vmul.f32 %v557, 1.442695
    %v561 = vpow.pop %v560
    %v562 = vsel %vm549, %v559, 0.0
    %563 = vadd.xlane.f32.xlu0 %v562
    %v564 = vpop.xlane.xlu0 %563
    %v565 = vsel %vm549, %v561, 0.0
    %566 = vadd.xlane.f32.xlu0 %v565
    %v567 = vpop.xlane.xlu0 %566
    %v568 = vrcp.pop %v564
    %v569 = vmul.f32 %v559, %v568
    %v570 = vrcp.pop %v567
    %v571 = vmul.f32 %v561, %v570
    %v572 = vlaneseq
    %v573 = vshrl.u32 %v572, 7
    %v574 = vsub.s32 0, %v573
    %v575 = vrot.slane %v232, %v574
    %v576 = vlaneseq
    %v577 = vshrl.u32 %v576, 7
    %v578 = vsub.s32 0, %v577
    %v579 = vrot.slane %v233, %v578
    %v581 = vsel %vm549, %v569, 0
    %v584 = vsel %vm549, %v571, 0
    %586 = vmatprep.subr.mxu0 %v435
    %587 = vmatpush1.msra.mxu0 %v433
    %588 = vmatprep.subr.mxu0 %v439
    %589 = vmatpush1.msra.mxu0 %v437
    %590 = vmatprep.subr.mxu0 0.0
    %591 = vmatpush1.msra.mxu0 0.0
    %592 = vmatprep.subr.mxu0 0.0
    %593 = vmatpush1.msra.mxu0 0.0
    %594 = vmatprep.subr.mxu0 0.0
    %595 = vmatpush1.msra.mxu0 0.0
    %596 = vmatprep.subr.mxu0 0.0
    %597 = vmatpush1.msra.mxu0 0.0
    %598 = vmatprep.subr.mxu0 0.0
    %599 = vmatpush1.msra.mxu0 0.0
    %600 = vmatprep.subr.mxu0 0.0
    %601 = vmatpush1.msra.mxu0 0.0
    %602 = vmatprep.subr.mxu0 0.0
    %603 = vmatpush1.msra.mxu0 0.0
    %604 = vmatprep.subr.mxu0 0.0
    %605 = vmatpush1.msra.mxu0 0.0
    %606 = vmatprep.subr.mxu0 0.0
    %607 = vmatpush1.msra.mxu0 0.0
    %608 = vmatprep.subr.mxu0 0.0
    %609 = vmatpush1.msra.mxu0 0.0
    %610 = vmatprep.subr.mxu0 0.0
    %611 = vmatpush1.msra.mxu0 0.0
    %612 = vmatprep.subr.mxu0 0.0
    %613 = vmatpush1.msra.mxu0 0.0
    %614 = vmatprep.subr.mxu0 0.0
    %615 = vmatpush1.msra.mxu0 0.0
    %616 = vmatprep.subr.mxu0 0.0
    %617 = vmatpush1.msra.mxu0 0.0
    %618 = vmatprep.subr.mxu0 0.0
    %619 = vmatpush1.msra.mxu0 0.0
    %620 = vmatprep.subr.mxu0 0.0
    %621 = vmatpush1.msra.mxu0 0.0
    %622 = vmatprep.subr.mxu0 0.0
    %623 = vmatpush1.msra.mxu0 0.0
    %624 = vmatprep.subr.mxu0 0.0
    %625 = vmatpush1.msra.mxu0 0.0
    %626 = vmatprep.subr.mxu0 0.0
    %627 = vmatpush1.msra.mxu0 0.0
    %628 = vmatprep.subr.mxu0 0.0
    %629 = vmatpush1.msra.mxu0 0.0
    %630 = vmatprep.subr.mxu0 0.0
    %631 = vmatpush1.msra.mxu0 0.0
    %632 = vmatprep.subr.mxu0 0.0
    %633 = vmatpush1.msra.mxu0 0.0
    %634 = vmatprep.subr.mxu0 0.0
    %635 = vmatpush1.msra.mxu0 0.0
    %636 = vmatprep.subr.mxu0 0.0
    %637 = vmatpush1.msra.mxu0 0.0
    %638 = vmatprep.subr.mxu0 0.0
    %639 = vmatpush1.msra.mxu0 0.0
    %640 = vmatprep.subr.mxu0 0.0
    %641 = vmatpush1.msra.mxu0 0.0
    %642 = vmatprep.subr.mxu0 0.0
    %643 = vmatpush1.msra.mxu0 0.0
    %644 = vmatprep.subr.mxu0 0.0
    %645 = vmatpush1.msra.mxu0 0.0
    %646 = vmatprep.subr.mxu0 0.0
    %647 = vmatpush1.msra.mxu0 0.0
    %648 = vmatprep.subr.mxu0 0.0
    %649 = vmatpush1.msra.mxu0 0.0
    %650 = vmatprep.mubr.f32.mxu0 0.0
    %651 = vmatmul.mubr.f32.gmra.mrb[0].mxu0 %v581
    %v652 = vpop.f32.mrb[0].mxu0
    %v653 = vadd.f32 %v575, %v652
    %v654 = vpop.f32.mrb[0].mxu0
    %v655 = vadd.f32 %v579, %v654
    %656 = vmatprep.mubr.f32.mxu0 0.0
    %657 = vmatmul.mubr.f32.gmra.mrb[0].mxu0 %v584
    %v658 = vpop.f32.mrb[0].mxu0
    %v659 = vadd.f32 %v575, %v658
    %v660 = vpop.f32.mrb[0].mxu0
    %v661 = vadd.f32 %v579, %v660
    %662 = vdwg.mxu0
    %vm663 = vcmp.gt.f32.partialorder %v653, 0.0
    %vm664 = vcmp.gt.f32.partialorder %v655, 0.0
    %vm665 = vcmp.gt.f32.partialorder %v659, 0.0
    %vm666 = vcmp.gt.f32.partialorder %v661, 0.0
    %v667 = vmul.f32 %v653, 0.01
    %v668 = vmul.f32 %v655, 0.01
    %v669 = vmul.f32 %v659, 0.01
    %v670 = vmul.f32 %v661, 0.01
    %v671 = vsel %vm663, %v653, %v667
    %v672 = vsel %vm664, %v655, %v668
    %v673 = vsel %vm665, %v659, %v669
    %v674 = vsel %vm666, %v661, %v670
    %v675 = vpack.c.bf16 %v673, %v671
    %v676 = vpack.c.bf16 %v674, %v672
    %v709 = vunpack.c.l.b16 %v136
    %v710 = vunpack.c.h.b16 %v136
    %v711 = vunpack.c.l.b16 %v137
    %v712 = vunpack.c.h.b16 %v137
    %v713 = vunpack.c.l.b16 %v138
    %v714 = vunpack.c.h.b16 %v138
    %v715 = vunpack.c.l.b16 %v139
    %v716 = vunpack.c.h.b16 %v139
    %v717 = vunpack.c.l.b16 %v140
    %v718 = vunpack.c.h.b16 %v140
    %v719 = vunpack.c.l.b16 %v141
    %v720 = vunpack.c.h.b16 %v141
    %v721 = vunpack.c.l.b16 %v142
    %v722 = vunpack.c.h.b16 %v142
    %v723 = vunpack.c.l.b16 %v143
    %v724 = vunpack.c.h.b16 %v143
    %v725 = vunpack.c.l.b16 %v144
    %v726 = vunpack.c.h.b16 %v144
    %v727 = vunpack.c.l.b16 %v145
    %v728 = vunpack.c.h.b16 %v145
    %v729 = vunpack.c.l.b16 %v146
    %v730 = vunpack.c.h.b16 %v146
    %v731 = vunpack.c.l.b16 %v147
    %v732 = vunpack.c.h.b16 %v147
    %v733 = vunpack.c.l.b16 %v148
    %v734 = vunpack.c.h.b16 %v148
    %v735 = vunpack.c.l.b16 %v149
    %v736 = vunpack.c.h.b16 %v149
    %v737 = vunpack.c.l.b16 %v150
    %v738 = vunpack.c.h.b16 %v150
    %v739 = vunpack.c.l.b16 %v151
    %v740 = vunpack.c.h.b16 %v151
    %v741 = vunpack.c.l.b16 %v152
    %v742 = vunpack.c.h.b16 %v152
    %v743 = vunpack.c.l.b16 %v153
    %v744 = vunpack.c.h.b16 %v153
    %v745 = vunpack.c.l.b16 %v154
    %v746 = vunpack.c.h.b16 %v154
    %v747 = vunpack.c.l.b16 %v155
    %v748 = vunpack.c.h.b16 %v155
    %v749 = vunpack.c.l.b16 %v156
    %v750 = vunpack.c.h.b16 %v156
    %v751 = vunpack.c.l.b16 %v157
    %v752 = vunpack.c.h.b16 %v157
    %v753 = vunpack.c.l.b16 %v158
    %v754 = vunpack.c.h.b16 %v158
    %v755 = vunpack.c.l.b16 %v159
    %v756 = vunpack.c.h.b16 %v159
    %v757 = vunpack.c.l.b16 %v160
    %v758 = vunpack.c.h.b16 %v160
    %v759 = vunpack.c.l.b16 %v161
    %v760 = vunpack.c.h.b16 %v161
    %v761 = vunpack.c.l.b16 %v162
    %v762 = vunpack.c.h.b16 %v162
    %v763 = vunpack.c.l.b16 %v163
    %v764 = vunpack.c.h.b16 %v163
    %v765 = vunpack.c.l.b16 %v164
    %v766 = vunpack.c.h.b16 %v164
    %v767 = vunpack.c.l.b16 %v165
    %v768 = vunpack.c.h.b16 %v165
    %v769 = vunpack.c.l.b16 %v166
    %v770 = vunpack.c.h.b16 %v166
    %v771 = vunpack.c.l.b16 %v167
    %v772 = vunpack.c.h.b16 %v167
    %v773 = vpack.c.b16 %v711, %v709
    %v774 = vpack.c.b16 %v712, %v710
    %v775 = vpack.c.b16 %v715, %v713
    %v776 = vpack.c.b16 %v716, %v714
    %v777 = vpack.c.b16 %v719, %v717
    %v778 = vpack.c.b16 %v720, %v718
    %v779 = vpack.c.b16 %v723, %v721
    %v780 = vpack.c.b16 %v724, %v722
    %v781 = vpack.c.b16 %v727, %v725
    %v782 = vpack.c.b16 %v728, %v726
    %v783 = vpack.c.b16 %v731, %v729
    %v784 = vpack.c.b16 %v732, %v730
    %v785 = vpack.c.b16 %v735, %v733
    %v786 = vpack.c.b16 %v736, %v734
    %v787 = vpack.c.b16 %v739, %v737
    %v788 = vpack.c.b16 %v740, %v738
    %v789 = vpack.c.b16 %v743, %v741
    %v790 = vpack.c.b16 %v744, %v742
    %v791 = vpack.c.b16 %v747, %v745
    %v792 = vpack.c.b16 %v748, %v746
    %v793 = vpack.c.b16 %v751, %v749
    %v794 = vpack.c.b16 %v752, %v750
    %v795 = vpack.c.b16 %v755, %v753
    %v796 = vpack.c.b16 %v756, %v754
    %v797 = vpack.c.b16 %v759, %v757
    %v798 = vpack.c.b16 %v760, %v758
    %v799 = vpack.c.b16 %v763, %v761
    %v800 = vpack.c.b16 %v764, %v762
    %v801 = vpack.c.b16 %v767, %v765
    %v802 = vpack.c.b16 %v768, %v766
    %v803 = vpack.c.b16 %v771, %v769
    %v804 = vpack.c.b16 %v772, %v770
    %837 = vmatprep.subr.bf16.mxu0 %v774
    %838 = vmatpush1.bf16.msra.mxu0 %v773
    %839 = vmatprep.subr.bf16.mxu0 %v776
    %840 = vmatpush1.bf16.msra.mxu0 %v775
    %841 = vmatprep.subr.bf16.mxu0 %v778
    %842 = vmatpush1.bf16.msra.mxu0 %v777
    %843 = vmatprep.subr.bf16.mxu0 %v780
    %844 = vmatpush1.bf16.msra.mxu0 %v779
    %845 = vmatprep.subr.bf16.mxu0 %v782
    %846 = vmatpush1.bf16.msra.mxu0 %v781
    %847 = vmatprep.subr.bf16.mxu0 %v784
    %848 = vmatpush1.bf16.msra.mxu0 %v783
    %849 = vmatprep.subr.bf16.mxu0 %v786
    %850 = vmatpush1.bf16.msra.mxu0 %v785
    %851 = vmatprep.subr.bf16.mxu0 %v788
    %852 = vmatpush1.bf16.msra.mxu0 %v787
    %853 = vmatprep.subr.bf16.mxu0 %v790
    %854 = vmatpush1.bf16.msra.mxu0 %v789
    %855 = vmatprep.subr.bf16.mxu0 %v792
    %856 = vmatpush1.bf16.msra.mxu0 %v791
    %857 = vmatprep.subr.bf16.mxu0 %v794
    %858 = vmatpush1.bf16.msra.mxu0 %v793
    %859 = vmatprep.subr.bf16.mxu0 %v796
    %860 = vmatpush1.bf16.msra.mxu0 %v795
    %861 = vmatprep.subr.bf16.mxu0 %v798
    %862 = vmatpush1.bf16.msra.mxu0 %v797
    %863 = vmatprep.subr.bf16.mxu0 %v800
    %864 = vmatpush1.bf16.msra.mxu0 %v799
    %865 = vmatprep.subr.bf16.mxu0 %v802
    %866 = vmatpush1.bf16.msra.mxu0 %v801
    %867 = vmatprep.subr.bf16.mxu0 %v804
    %868 = vmatpush1.bf16.msra.mxu0 %v803
    %869 = vmatprep.mubr.bf16.mxu0 %v676
    %870 = vmatmul.mubr.bf16.gmra.mrb[0].mxu0 %v675
    %v871 = vpop.f32.mrb[0].mxu0
    %v872 = vadd.f32 0.0, %v871
    %v873 = vpop.f32.mrb[0].mxu0
    %v874 = vadd.f32 0.0, %v873
    %v875 = vpop.f32.mrb[0].mxu0
    %v876 = vadd.f32 0.0, %v875
    %v877 = vpop.f32.mrb[0].mxu0
    %v878 = vadd.f32 0.0, %v877
    %879 = vdwg.mxu0
    %v880 = vmul.f32 %v872, %v444
    %v881 = vmul.f32 %v874, %v448
    %v882 = vmul.f32 %v876, %v444
    %v883 = vmul.f32 %v878, %v448
    %v884 = vadd.f32 %v880, %v881
    %885 = vadd.xlane.f32.xlu0 %v884
    %v886 = vpop.xlane.xlu0 %885
    %v887 = vadd.f32 %v882, %v883
    %888 = vadd.xlane.f32.xlu0 %v887
    %v889 = vpop.xlane.xlu0 %888
    %v890 = vrot.slane %v232, 6
    %v891 = vrot.slane %v233, 6
    %894 = vmatprep.subr.mxu0 %v874
    %895 = vmatpush1.xpose.msra.mxu0 %v872
    %896 = vmatprep.subr.mxu0 %v878
    %897 = vmatpush1.xpose.msra.mxu0 %v876
    %898 = vmatprep.subr.mxu0 0.0
    %899 = vmatpush1.xpose.msra.mxu0 0.0
    %900 = vmatprep.subr.mxu0 0.0
    %901 = vmatpush1.xpose.msra.mxu0 0.0
    %902 = vmatprep.subr.mxu0 0.0
    %903 = vmatpush1.xpose.msra.mxu0 0.0
    %904 = vmatprep.subr.mxu0 0.0
    %905 = vmatpush1.xpose.msra.mxu0 0.0
    %906 = vmatprep.subr.mxu0 0.0
    %907 = vmatpush1.xpose.msra.mxu0 0.0
    %908 = vmatprep.subr.mxu0 0.0
    %909 = vmatpush1.xpose.msra.mxu0 0.0
    %910 = vmatprep.subr.mxu0 0.0
    %911 = vmatpush1.xpose.msra.mxu0 0.0
    %912 = vmatprep.subr.mxu0 0.0
    %913 = vmatpush1.xpose.msra.mxu0 0.0
    %914 = vmatprep.subr.mxu0 0.0
    %915 = vmatpush1.xpose.msra.mxu0 0.0
    %916 = vmatprep.subr.mxu0 0.0
    %917 = vmatpush1.xpose.msra.mxu0 0.0
    %918 = vmatprep.subr.mxu0 0.0
    %919 = vmatpush1.xpose.msra.mxu0 0.0
    %920 = vmatprep.subr.mxu0 0.0
    %921 = vmatpush1.xpose.msra.mxu0 0.0
    %922 = vmatprep.subr.mxu0 0.0
    %923 = vmatpush1.xpose.msra.mxu0 0.0
    %924 = vmatprep.subr.mxu0 0.0
    %925 = vmatpush1.xpose.msra.mxu0 0.0
    %926 = vmatprep.subr.mxu0 0.0
    %927 = vmatpush1.xpose.msra.mxu0 0.0
    %928 = vmatprep.subr.mxu0 0.0
    %929 = vmatpush1.xpose.msra.mxu0 0.0
    %930 = vmatprep.subr.mxu0 0.0
    %931 = vmatpush1.xpose.msra.mxu0 0.0
    %932 = vmatprep.subr.mxu0 0.0
    %933 = vmatpush1.xpose.msra.mxu0 0.0
    %934 = vmatprep.subr.mxu0 0.0
    %935 = vmatpush1.xpose.msra.mxu0 0.0
    %936 = vmatprep.subr.mxu0 0.0
    %937 = vmatpush1.xpose.msra.mxu0 0.0
    %938 = vmatprep.subr.mxu0 0.0
    %939 = vmatpush1.xpose.msra.mxu0 0.0
    %940 = vmatprep.subr.mxu0 0.0
    %941 = vmatpush1.xpose.msra.mxu0 0.0
    %942 = vmatprep.subr.mxu0 0.0
    %943 = vmatpush1.xpose.msra.mxu0 0.0
    %944 = vmatprep.subr.mxu0 0.0
    %945 = vmatpush1.xpose.msra.mxu0 0.0
    %946 = vmatprep.subr.mxu0 0.0
    %947 = vmatpush1.xpose.msra.mxu0 0.0
    %948 = vmatprep.subr.mxu0 0.0
    %949 = vmatpush1.xpose.msra.mxu0 0.0
    %950 = vmatprep.subr.mxu0 0.0
    %951 = vmatpush1.xpose.msra.mxu0 0.0
    %952 = vmatprep.subr.mxu0 0.0
    %953 = vmatpush1.xpose.msra.mxu0 0.0
    %954 = vmatprep.subr.mxu0 0.0
    %955 = vmatpush1.xpose.msra.mxu0 0.0
    %956 = vmatprep.subr.mxu0 0.0
    %957 = vmatpush1.xpose.msra.mxu0 0.0
    %958 = vmatprep.mubr.f32.mxu0 %v891
    %959 = vmatmul.mubr.f32.gmra.mrb[0].mxu0 %v890
    %v960 = vpop.f32.mrb[0].mxu0
    %v961 = vadd.f32 0.0, %v960
    %v962 = vpop.f32.mrb[0].mxu0
    %963 = vdwg.mxu0
    %v964 = vlaneseq
    %v965 = vshrl.u32 %v964, 7
    %v966 = vsub.s32 0, %v965
    %v967 = vrot.slane %v961, %v966
    %v968 = vadd.f32 %v886, %v967
    %v969 = vadd.f32 %v889, %v967
    %vm970 = vcmp.gt.f32.partialorder %v968, 0.0
    %vm971 = vcmp.gt.f32.partialorder %v969, 0.0
    %v972 = vmul.f32 %v968, 0.2
    %v973 = vmul.f32 %v969, 0.2
    %v974 = vsel %vm970, %v968, %v972
    %v975 = vsel %vm971, %v969, %v973
    %v976 = vadd.f32 %v974, %v234
    %v977 = vadd.f32 %v975, %v235
    %v978 = vsel %vm549, %v976, -inf
    %979 = vmax.xlane.f32.xlu0 %v978
    %v980 = vpop.xlane.xlu0 %979
    %v981 = vsel %vm549, %v977, -inf
    %982 = vmax.xlane.f32.xlu0 %v981
    %v983 = vpop.xlane.xlu0 %982
    %v984 = vsub.f32 %v976, %v980
    %v985 = vsub.f32 %v977, %v983
    %v986 = vmul.f32 %v984, 1.442695
    %v987 = vpow.pop %v986
    %v988 = vmul.f32 %v985, 1.442695
    %v989 = vpow.pop %v988
    %v990 = vsel %vm549, %v987, 0.0
    %991 = vadd.xlane.f32.xlu0 %v990
    %v992 = vpop.xlane.xlu0 %991
    %v993 = vsel %vm549, %v989, 0.0
    %994 = vadd.xlane.f32.xlu0 %v993
    %v995 = vpop.xlane.xlu0 %994
    %v996 = vrcp.pop %v992
    %v997 = vmul.f32 %v987, %v996
    %v998 = vrcp.pop %v995
    %v999 = vmul.f32 %v989, %v998
    %v1000 = vlaneseq
    %v1001 = vshrl.u32 %v1000, 7
    %v1002 = vsub.s32 1, %v1001
    %v1003 = vrot.slane %v232, %v1002
    %v1004 = vlaneseq
    %v1005 = vshrl.u32 %v1004, 7
    %v1006 = vsub.s32 1, %v1005
    %v1007 = vrot.slane %v233, %v1006
    %v1009 = vsel %vm549, %v997, 0
    %v1012 = vsel %vm549, %v999, 0
    %1014 = vmatprep.subr.mxu0 %v874
    %1015 = vmatpush1.msra.mxu0 %v872
    %1016 = vmatprep.subr.mxu0 %v878
    %1017 = vmatpush1.msra.mxu0 %v876
    %1018 = vmatprep.subr.mxu0 0.0
    %1019 = vmatpush1.msra.mxu0 0.0
    %1020 = vmatprep.subr.mxu0 0.0
    %1021 = vmatpush1.msra.mxu0 0.0
    %1022 = vmatprep.subr.mxu0 0.0
    %1023 = vmatpush1.msra.mxu0 0.0
    %1024 = vmatprep.subr.mxu0 0.0
    %1025 = vmatpush1.msra.mxu0 0.0
    %1026 = vmatprep.subr.mxu0 0.0
    %1027 = vmatpush1.msra.mxu0 0.0
    %1028 = vmatprep.subr.mxu0 0.0
    %1029 = vmatpush1.msra.mxu0 0.0
    %1030 = vmatprep.subr.mxu0 0.0
    %1031 = vmatpush1.msra.mxu0 0.0
    %1032 = vmatprep.subr.mxu0 0.0
    %1033 = vmatpush1.msra.mxu0 0.0
    %1034 = vmatprep.subr.mxu0 0.0
    %1035 = vmatpush1.msra.mxu0 0.0
    %1036 = vmatprep.subr.mxu0 0.0
    %1037 = vmatpush1.msra.mxu0 0.0
    %1038 = vmatprep.subr.mxu0 0.0
    %1039 = vmatpush1.msra.mxu0 0.0
    %1040 = vmatprep.subr.mxu0 0.0
    %1041 = vmatpush1.msra.mxu0 0.0
    %1042 = vmatprep.subr.mxu0 0.0
    %1043 = vmatpush1.msra.mxu0 0.0
    %1044 = vmatprep.subr.mxu0 0.0
    %1045 = vmatpush1.msra.mxu0 0.0
    %1046 = vmatprep.subr.mxu0 0.0
    %1047 = vmatpush1.msra.mxu0 0.0
    %1048 = vmatprep.subr.mxu0 0.0
    %1049 = vmatpush1.msra.mxu0 0.0
    %1050 = vmatprep.subr.mxu0 0.0
    %1051 = vmatpush1.msra.mxu0 0.0
    %1052 = vmatprep.subr.mxu0 0.0
    %1053 = vmatpush1.msra.mxu0 0.0
    %1054 = vmatprep.subr.mxu0 0.0
    %1055 = vmatpush1.msra.mxu0 0.0
    %1056 = vmatprep.subr.mxu0 0.0
    %1057 = vmatpush1.msra.mxu0 0.0
    %1058 = vmatprep.subr.mxu0 0.0
    %1059 = vmatpush1.msra.mxu0 0.0
    %1060 = vmatprep.subr.mxu0 0.0
    %1061 = vmatpush1.msra.mxu0 0.0
    %1062 = vmatprep.subr.mxu0 0.0
    %1063 = vmatpush1.msra.mxu0 0.0
    %1064 = vmatprep.subr.mxu0 0.0
    %1065 = vmatpush1.msra.mxu0 0.0
    %1066 = vmatprep.subr.mxu0 0.0
    %1067 = vmatpush1.msra.mxu0 0.0
    %1068 = vmatprep.subr.mxu0 0.0
    %1069 = vmatpush1.msra.mxu0 0.0
    %1070 = vmatprep.subr.mxu0 0.0
    %1071 = vmatpush1.msra.mxu0 0.0
    %1072 = vmatprep.subr.mxu0 0.0
    %1073 = vmatpush1.msra.mxu0 0.0
    %1074 = vmatprep.subr.mxu0 0.0
    %1075 = vmatpush1.msra.mxu0 0.0
    %1076 = vmatprep.subr.mxu0 0.0
    %1077 = vmatpush1.msra.mxu0 0.0
    %1078 = vmatprep.mubr.f32.mxu0 0.0
    %1079 = vmatmul.mubr.f32.gmra.mrb[0].mxu0 %v1009
    %v1080 = vpop.f32.mrb[0].mxu0
    %v1081 = vadd.f32 %v1003, %v1080
    %v1082 = vpop.f32.mrb[0].mxu0
    %v1083 = vadd.f32 %v1007, %v1082
    %1084 = vmatprep.mubr.f32.mxu0 0.0
    %1085 = vmatmul.mubr.f32.gmra.mrb[0].mxu0 %v1012
    %v1086 = vpop.f32.mrb[0].mxu0
    %v1087 = vadd.f32 %v1003, %v1086
    %v1088 = vpop.f32.mrb[0].mxu0
    %v1089 = vadd.f32 %v1007, %v1088
    %1090 = vdwg.mxu0
    %vm1091 = vcmp.gt.f32.partialorder %v1081, 0.0
    %vm1092 = vcmp.gt.f32.partialorder %v1083, 0.0
    %vm1093 = vcmp.gt.f32.partialorder %v1087, 0.0
    %vm1094 = vcmp.gt.f32.partialorder %v1089, 0.0
    %v1095 = vmul.f32 %v1081, 0.01
    %v1096 = vmul.f32 %v1083, 0.01
    %v1097 = vmul.f32 %v1087, 0.01
    %v1098 = vmul.f32 %v1089, 0.01
    %v1099 = vsel %vm1091, %v1081, %v1095
    %v1100 = vsel %vm1092, %v1083, %v1096
    %v1101 = vsel %vm1093, %v1087, %v1097
    %v1102 = vsel %vm1094, %v1089, %v1098
    %v1103 = vpack.c.bf16 %v1101, %v1099
    %v1104 = vpack.c.bf16 %v1102, %v1100
    %v1105 = vlaneseq
    %v1106 = vshrl.u32 %v1105, 7
    %v1107 = vsub.s32 2, %v1106
    %v1108 = vrot.slane %v232, %v1107
    %v1141 = vunpack.c.l.b16 %v168
    %v1142 = vunpack.c.l.b16 %v169
    %v1143 = vunpack.c.l.b16 %v170
    %v1144 = vunpack.c.l.b16 %v171
    %v1145 = vunpack.c.l.b16 %v172
    %v1146 = vunpack.c.l.b16 %v173
    %v1147 = vunpack.c.l.b16 %v174
    %v1148 = vunpack.c.l.b16 %v175
    %v1149 = vunpack.c.l.b16 %v176
    %v1150 = vunpack.c.l.b16 %v177
    %v1151 = vunpack.c.l.b16 %v178
    %v1152 = vunpack.c.l.b16 %v179
    %v1153 = vunpack.c.l.b16 %v180
    %v1154 = vunpack.c.l.b16 %v181
    %v1155 = vunpack.c.l.b16 %v182
    %v1156 = vunpack.c.l.b16 %v183
    %v1157 = vunpack.c.l.b16 %v184
    %v1158 = vunpack.c.l.b16 %v185
    %v1159 = vunpack.c.l.b16 %v186
    %v1160 = vunpack.c.l.b16 %v187
    %v1161 = vunpack.c.l.b16 %v188
    %v1162 = vunpack.c.l.b16 %v189
    %v1163 = vunpack.c.l.b16 %v190
    %v1164 = vunpack.c.l.b16 %v191
    %v1165 = vunpack.c.l.b16 %v192
    %v1166 = vunpack.c.l.b16 %v193
    %v1167 = vunpack.c.l.b16 %v194
    %v1168 = vunpack.c.l.b16 %v195
    %v1169 = vunpack.c.l.b16 %v196
    %v1170 = vunpack.c.l.b16 %v197
    %v1171 = vunpack.c.l.b16 %v198
    %v1172 = vunpack.c.l.b16 %v199
    %v1173 = vpack.c.b16 %v1142, %v1141
    %v1174 = vpack.c.b16 %v1144, %v1143
    %v1175 = vpack.c.b16 %v1146, %v1145
    %v1176 = vpack.c.b16 %v1148, %v1147
    %v1177 = vpack.c.b16 %v1150, %v1149
    %v1178 = vpack.c.b16 %v1152, %v1151
    %v1179 = vpack.c.b16 %v1154, %v1153
    %v1180 = vpack.c.b16 %v1156, %v1155
    %v1181 = vpack.c.b16 %v1158, %v1157
    %v1182 = vpack.c.b16 %v1160, %v1159
    %v1183 = vpack.c.b16 %v1162, %v1161
    %v1184 = vpack.c.b16 %v1164, %v1163
    %v1185 = vpack.c.b16 %v1166, %v1165
    %v1186 = vpack.c.b16 %v1168, %v1167
    %v1187 = vpack.c.b16 %v1170, %v1169
    %v1188 = vpack.c.b16 %v1172, %v1171
    %1205 = vmatprep.subr.bf16.mxu0 0
    %1206 = vmatpush1.bf16.msra.mxu0 %v1173
    %1207 = vmatprep.subr.bf16.mxu0 0
    %1208 = vmatpush1.bf16.msra.mxu0 %v1174
    %1209 = vmatprep.subr.bf16.mxu0 0
    %1210 = vmatpush1.bf16.msra.mxu0 %v1175
    %1211 = vmatprep.subr.bf16.mxu0 0
    %1212 = vmatpush1.bf16.msra.mxu0 %v1176
    %1213 = vmatprep.subr.bf16.mxu0 0
    %1214 = vmatpush1.bf16.msra.mxu0 %v1177
    %1215 = vmatprep.subr.bf16.mxu0 0
    %1216 = vmatpush1.bf16.msra.mxu0 %v1178
    %1217 = vmatprep.subr.bf16.mxu0 0
    %1218 = vmatpush1.bf16.msra.mxu0 %v1179
    %1219 = vmatprep.subr.bf16.mxu0 0
    %1220 = vmatpush1.bf16.msra.mxu0 %v1180
    %1221 = vmatprep.subr.bf16.mxu0 0
    %1222 = vmatpush1.bf16.msra.mxu0 %v1181
    %1223 = vmatprep.subr.bf16.mxu0 0
    %1224 = vmatpush1.bf16.msra.mxu0 %v1182
    %1225 = vmatprep.subr.bf16.mxu0 0
    %1226 = vmatpush1.bf16.msra.mxu0 %v1183
    %1227 = vmatprep.subr.bf16.mxu0 0
    %1228 = vmatpush1.bf16.msra.mxu0 %v1184
    %1229 = vmatprep.subr.bf16.mxu0 0
    %1230 = vmatpush1.bf16.msra.mxu0 %v1185
    %1231 = vmatprep.subr.bf16.mxu0 0
    %1232 = vmatpush1.bf16.msra.mxu0 %v1186
    %1233 = vmatprep.subr.bf16.mxu0 0
    %1234 = vmatpush1.bf16.msra.mxu0 %v1187
    %1235 = vmatprep.subr.bf16.mxu0 0
    %1236 = vmatpush1.bf16.msra.mxu0 %v1188
    %1237 = vmatprep.mubr.bf16.mxu0 %v1104
    %1238 = vmatmul.mubr.bf16.gmra.mrb[0].mxu0 %v1103
    %v1239 = vpop.f32.mrb[0].mxu0
    %v1240 = vadd.f32 %v1108, %v1239
    %v1241 = vpop.f32.mrb[0].mxu0
    %v1242 = vpop.f32.mrb[0].mxu0
    %v1243 = vadd.f32 %v1108, %v1242
    %v1244 = vpop.f32.mrb[0].mxu0
    %1245 = vdwg.mxu0
    %v1246 = vmax.f32 %v1240, 0.0
    %v1247 = vmax.f32 %v1243, 0.0
    %v1248 = vpack.c.bf16 %v1247, %v1246
    %v1249 = vlaneseq
    %v1250 = vshrl.u32 %v1249, 7
    %v1251 = vsub.s32 3, %v1250
    %v1252 = vrot.slane %v232, %v1251
    %v1269 = vunpack.c.l.b16 %v200
    %v1270 = vunpack.c.l.b16 %v201
    %v1271 = vunpack.c.l.b16 %v202
    %v1272 = vunpack.c.l.b16 %v203
    %v1273 = vunpack.c.l.b16 %v204
    %v1274 = vunpack.c.l.b16 %v205
    %v1275 = vunpack.c.l.b16 %v206
    %v1276 = vunpack.c.l.b16 %v207
    %v1277 = vunpack.c.l.b16 %v208
    %v1278 = vunpack.c.l.b16 %v209
    %v1279 = vunpack.c.l.b16 %v210
    %v1280 = vunpack.c.l.b16 %v211
    %v1281 = vunpack.c.l.b16 %v212
    %v1282 = vunpack.c.l.b16 %v213
    %v1283 = vunpack.c.l.b16 %v214
    %v1284 = vunpack.c.l.b16 %v215
    %v1285 = vpack.c.b16 %v1270, %v1269
    %v1286 = vpack.c.b16 %v1272, %v1271
    %v1287 = vpack.c.b16 %v1274, %v1273
    %v1288 = vpack.c.b16 %v1276, %v1275
    %v1289 = vpack.c.b16 %v1278, %v1277
    %v1290 = vpack.c.b16 %v1280, %v1279
    %v1291 = vpack.c.b16 %v1282, %v1281
    %v1292 = vpack.c.b16 %v1284, %v1283
    %1301 = vmatprep.subr.bf16.mxu0 0
    %1302 = vmatpush1.bf16.msra.mxu0 %v1285
    %1303 = vmatprep.subr.bf16.mxu0 0
    %1304 = vmatpush1.bf16.msra.mxu0 %v1286
    %1305 = vmatprep.subr.bf16.mxu0 0
    %1306 = vmatpush1.bf16.msra.mxu0 %v1287
    %1307 = vmatprep.subr.bf16.mxu0 0
    %1308 = vmatpush1.bf16.msra.mxu0 %v1288
    %1309 = vmatprep.subr.bf16.mxu0 0
    %1310 = vmatpush1.bf16.msra.mxu0 %v1289
    %1311 = vmatprep.subr.bf16.mxu0 0
    %1312 = vmatpush1.bf16.msra.mxu0 %v1290
    %1313 = vmatprep.subr.bf16.mxu0 0
    %1314 = vmatpush1.bf16.msra.mxu0 %v1291
    %1315 = vmatprep.subr.bf16.mxu0 0
    %1316 = vmatpush1.bf16.msra.mxu0 %v1292
    %1317 = vmatprep.subr.bf16.mxu0 0
    %1318 = vmatpush1.bf16.msra.mxu0 0
    %1319 = vmatprep.subr.bf16.mxu0 0
    %1320 = vmatpush1.bf16.msra.mxu0 0
    %1321 = vmatprep.subr.bf16.mxu0 0
    %1322 = vmatpush1.bf16.msra.mxu0 0
    %1323 = vmatprep.subr.bf16.mxu0 0
    %1324 = vmatpush1.bf16.msra.mxu0 0
    %1325 = vmatprep.subr.bf16.mxu0 0
    %1326 = vmatpush1.bf16.msra.mxu0 0
    %1327 = vmatprep.subr.bf16.mxu0 0
    %1328 = vmatpush1.bf16.msra.mxu0 0
    %1329 = vmatprep.subr.bf16.mxu0 0
    %1330 = vmatpush1.bf16.msra.mxu0 0
    %1331 = vmatprep.subr.bf16.mxu0 0
    %1332 = vmatpush1.bf16.msra.mxu0 0
    %1333 = vmatprep.mubr.bf16.mxu0 0
    %1334 = vmatmul.mubr.bf16.gmra.mrb[0].mxu0 %v1248
    %v1335 = vpop.f32.mrb[0].mxu0
    %v1336 = vadd.f32 %v1252, %v1335
    %v1337 = vpop.f32.mrb[0].mxu0
    %v1338 = vpop.f32.mrb[0].mxu0
    %v1339 = vadd.f32 %v1252, %v1338
    %v1340 = vpop.f32.mrb[0].mxu0
    %1341 = vdwg.mxu0
    %v1342 = vmax.f32 %v1336, 0.0
    %v1343 = vmax.f32 %v1339, 0.0
    %v1344 = vpack.c.bf16 %v1343, %v1342
    %v1345 = vlaneseq
    %v1346 = vshrl.u32 %v1345, 7
    %v1347 = vsub.s32 4, %v1346
    %v1348 = vrot.slane %v232, %v1347
    %v1365 = vunpack.c.l.b16 %v216
    %v1366 = vunpack.c.l.b16 %v217
    %v1367 = vunpack.c.l.b16 %v218
    %v1368 = vunpack.c.l.b16 %v219
    %v1369 = vunpack.c.l.b16 %v220
    %v1370 = vunpack.c.l.b16 %v221
    %v1371 = vunpack.c.l.b16 %v222
    %v1372 = vunpack.c.l.b16 %v223
    %v1373 = vunpack.c.l.b16 %v224
    %v1374 = vunpack.c.l.b16 %v225
    %v1375 = vunpack.c.l.b16 %v226
    %v1376 = vunpack.c.l.b16 %v227
    %v1377 = vunpack.c.l.b16 %v228
    %v1378 = vunpack.c.l.b16 %v229
    %v1379 = vunpack.c.l.b16 %v230
    %v1380 = vunpack.c.l.b16 %v231
    %v1381 = vpack.c.b16 %v1366, %v1365
    %v1382 = vpack.c.b16 %v1368, %v1367
    %v1383 = vpack.c.b16 %v1370, %v1369
    %v1384 = vpack.c.b16 %v1372, %v1371
    %v1385 = vpack.c.b16 %v1374, %v1373
    %v1386 = vpack.c.b16 %v1376, %v1375
    %v1387 = vpack.c.b16 %v1378, %v1377
    %v1388 = vpack.c.b16 %v1380, %v1379
    %1397 = vmatprep.subr.bf16.mxu0 0
    %1398 = vmatpush1.bf16.msra.mxu0 %v1381
    %1399 = vmatprep.subr.bf16.mxu0 0
    %1400 = vmatpush1.bf16.msra.mxu0 %v1382
    %1401 = vmatprep.subr.bf16.mxu0 0
    %1402 = vmatpush1.bf16.msra.mxu0 %v1383
    %1403 = vmatprep.subr.bf16.mxu0 0
    %1404 = vmatpush1.bf16.msra.mxu0 %v1384
    %1405 = vmatprep.subr.bf16.mxu0 0
    %1406 = vmatpush1.bf16.msra.mxu0 %v1385
    %1407 = vmatprep.subr.bf16.mxu0 0
    %1408 = vmatpush1.bf16.msra.mxu0 %v1386
    %1409 = vmatprep.subr.bf16.mxu0 0
    %1410 = vmatpush1.bf16.msra.mxu0 %v1387
    %1411 = vmatprep.subr.bf16.mxu0 0
    %1412 = vmatpush1.bf16.msra.mxu0 %v1388
    %1413 = vmatprep.subr.bf16.mxu0 0
    %1414 = vmatpush1.bf16.msra.mxu0 0
    %1415 = vmatprep.subr.bf16.mxu0 0
    %1416 = vmatpush1.bf16.msra.mxu0 0
    %1417 = vmatprep.subr.bf16.mxu0 0
    %1418 = vmatpush1.bf16.msra.mxu0 0
    %1419 = vmatprep.subr.bf16.mxu0 0
    %1420 = vmatpush1.bf16.msra.mxu0 0
    %1421 = vmatprep.subr.bf16.mxu0 0
    %1422 = vmatpush1.bf16.msra.mxu0 0
    %1423 = vmatprep.subr.bf16.mxu0 0
    %1424 = vmatpush1.bf16.msra.mxu0 0
    %1425 = vmatprep.subr.bf16.mxu0 0
    %1426 = vmatpush1.bf16.msra.mxu0 0
    %1427 = vmatprep.subr.bf16.mxu0 0
    %1428 = vmatpush1.bf16.msra.mxu0 0
    %1429 = vmatprep.mubr.bf16.mxu0 0
    %1430 = vmatmul.mubr.bf16.gmra.mrb[0].mxu0 %v1344
    %v1431 = vpop.f32.mrb[0].mxu0
    %v1432 = vadd.f32 %v1348, %v1431
    %v1433 = vpop.f32.mrb[0].mxu0
    %v1434 = vpop.f32.mrb[0].mxu0
    %v1435 = vadd.f32 %v1348, %v1434
    %v1436 = vpop.f32.mrb[0].mxu0
    %1437 = vdwg.mxu0
    %1438 = vst [vmem:[%s8] sm:$0xff] %v1432
    %1439 = vst [vmem:[%s8 + $0x8] sm:$0xff] %v1435
    // Predicated region
    $region54: #{gat_localization_forward.1} parent=1 // pred_check
      _
    $region55: #{gat_localization_forward.1} parent=1 // pred_check_branch
      %1441 = sbr.rel (0) target = $region57
    $region56: #{gat_localization_forward.1} parent=1 // pred_region
      _
    $region57: #{gat_localization_forward.1} parent=1 // pred_fallthru
      _
    // Predicated region
    $region58: #{gat_localization_forward.1} parent=1 // pred_check
      _
    $region59: #{gat_localization_forward.1} parent=1 // pred_check_branch
      %1443 = sbr.rel (0) target = $region61
    $region60: #{gat_localization_forward.1} parent=1 // pred_region
      _
    $region61: #{gat_localization_forward.1} parent=1 // pred_fallthru
      _
    %1444 = vsyncpa [#allocation3], 1
    %1445 = vsyncpa [#allocation5], 1
    %1446 = vsyncpa [#allocation8], 1

</llo_original>
